<compile_context>
chip_gen: v6e
topology: v6e:2x2x1
jax: 0.10.0
libtpu: 0.0.40
codegen_flags: <defaults>
</compile_context>

<pallas_src>
import jax
import jax.numpy as jnp
from jax.experimental import pallas as pl
from jax.experimental.pallas import tpu as pltpu

EPS = 1e-5
N_HEADS = 2
LANES = 128


def mnf_kernel(
    # activations
    audio_ref, video_ref,
    # gated_feature_composer: Linear(2D, D/2) (split into two halves) + BN + Linear(D/2, D)
    w0a_ref, w0b_ref, b0_ref, bn0_g_ref, bn0_b_ref,
    w1t_ref, b1_ref,
    # MultiheadAttention, pre-split per head & pre-transposed in the wrapper
    wq_ref, wk_ref, wv_ref, bq_ref, bk_ref, bv_ref,    # [H, D, hd] / [H, 1, hd]
    wo_ref, ob_ref,                                     # [H, hd, D] / [1, D]
    # trans_sv: Linear + BN
    wsv_ref, bsv_ref, bnsv_g_ref, bnsv_b_ref,
    # classifier
    wcls_ref, bcls_ref,
    # packed output: [audio_w | sel_audio | sel_video | attn_w | pred | pad]
    packed_ref,
):
    f32, bf16 = jnp.float32, jnp.bfloat16
    audio = audio_ref[...].astype(f32)          # [B, D]
    video = video_ref[...].astype(f32)          # [B, S, D]
    B, D = audio.shape
    S = video.shape[1]
    hd = D // N_HEADS
    C = bcls_ref.shape[-1]

    def mm(x, w):   # bf16 MXU matmul, f32 accumulation (weights already bf16)
        return jnp.dot(x.astype(bf16), w.astype(bf16), preferred_element_type=f32)

    # ---- video_feature = video_feature_map.mean(dim=1) ------------------------
    video_mean = jnp.mean(video, axis=1)        # [B, D]

    # ---- gated_feature_composer(cat([audio, video_mean])) ---------------------
    # cat([a, v]) @ W0.T == a @ W0[:, :D].T + v @ W0[:, D:].T (split done in wrapper)
    h = mm(audio, w0a_ref[...]) + mm(video_mean, w0b_ref[...]) + b0_ref[...]   # [B, D/2]
    mu = jnp.mean(h, axis=0, keepdims=True)               # BatchNorm1d, training mode
    var = jnp.mean((h - mu) ** 2, axis=0, keepdims=True)  # biased variance
    h = (h - mu) * jax.lax.rsqrt(var + EPS) * bn0_g_ref[...] + bn0_b_ref[...]
    h = jnp.maximum(h, 0.0)
    audio_weight = jax.nn.sigmoid(mm(h, w1t_ref[...]) + b1_ref[...])           # [B, D]

    # ---- gated (selected) audio feature ----------------------------------------
    sel_audio = audio_weight * audio            # [B, D]

    # ---- MultiheadAttention(query=[1,B,D], key=value=[S,B,D]) ------------------
    sel_audio_b = sel_audio.astype(bf16)
    video_b = video.reshape(B * S, D).astype(bf16)
    scale = 1.0 / jnp.sqrt(jnp.float32(hd))

    attn_out = jnp.zeros((B, D), f32)
    attn_w_acc = jnp.zeros((B, S), f32)
    for hh in range(N_HEADS):                   # static 2-iteration loop
        q = (jnp.dot(sel_audio_b, wq_ref[hh], preferred_element_type=f32)
             + bq_ref[hh]).reshape(B, 1, hd)                               # [B, 1, hd]
        k = (jnp.dot(video_b, wk_ref[hh], preferred_element_type=f32)
             + bk_ref[hh]).reshape(B, S, hd)                               # [B, S, hd]
        v = (jnp.dot(video_b, wv_ref[hh], preferred_element_type=f32)
             + bv_ref[hh]).reshape(B, S, hd)                               # [B, S, hd]
        s = jnp.einsum('bqd,bkd->bqk', q.astype(bf16), k.astype(bf16),
                       preferred_element_type=f32) * scale                 # [B, 1, S]
        s = s - jnp.max(s, axis=-1, keepdims=True)
        e = jnp.exp(s)
        p = e * pl.reciprocal(jnp.sum(e, axis=-1, keepdims=True), approx=True)
        attn_w_acc = attn_w_acc + p.reshape(B, S)
        ctx = jnp.einsum('bqk,bkd->bqd', p.astype(bf16), v.astype(bf16),
                         preferred_element_type=f32).reshape(B, hd)        # [B, hd]
        # out-projection accumulated per head (head concat avoided: per-head Wo
        # column block pre-transposed in the wrapper)
        attn_out = attn_out + mm(ctx, wo_ref[hh])
    attn_out = attn_out + ob_ref[...]                                      # [B, D]
    attn_w = attn_w_acc * (1.0 / N_HEADS)       # head-averaged attention weights

    # ---- trans_sv: Linear + BatchNorm1d + ReLU ---------------------------------
    t = mm(attn_out, wsv_ref[...]) + bsv_ref[...]
    mu2 = jnp.mean(t, axis=0, keepdims=True)
    var2 = jnp.mean((t - mu2) ** 2, axis=0, keepdims=True)
    t = (t - mu2) * jax.lax.rsqrt(var2 + EPS) * bnsv_g_ref[...] + bnsv_b_ref[...]
    sel_video = jnp.maximum(t, 0.0)             # [B, D]

    # ---- classifier -------------------------------------------------------------
    pred = mm(sel_video, wcls_ref[...]) + bcls_ref[...]                    # [B, C]

    # ---- single lane-dense store -------------------------------------------------
    parts = [audio_weight, sel_audio, sel_video, attn_w, pred]
    used = 3 * D + S + C
    pad = packed_ref.shape[-1] - used
    if pad > 0:
        parts.append(jnp.zeros((B, pad), f32))
    packed_ref[...] = jnp.concatenate(parts, axis=-1).astype(packed_ref.dtype)


def mnf_forward(params, audio_feature, video_feature_map):
    B, D = audio_feature.shape
    S = video_feature_map.shape[1]
    C = params["w_cls"].shape[0]
    assert D % N_HEADS == 0, "embed_dim must be divisible by num_heads"
    hd = D // N_HEADS
    f32, bf16 = jnp.float32, jnp.bfloat16

    row = lambda x: x.reshape(1, -1).astype(f32)            # biases / BN params as [1, n]
    wt = lambda w: jnp.asarray(w.T, dtype=bf16)             # pre-transposed bf16 weight

    # MultiheadAttention projections, pre-split per head (PyTorch packs q/k/v as row
    # blocks of in_proj_weight; heads are contiguous feature slices).
    ipw, ipb = params["in_proj_w"], params["in_proj_b"]
    wq, wk, wv = ipw[:D], ipw[D:2 * D], ipw[2 * D:]
    bq, bk, bv = ipb[:D], ipb[D:2 * D], ipb[2 * D:]
    split_w = lambda w: jnp.stack(
        [jnp.asarray(w[h * hd:(h + 1) * hd].T, dtype=bf16) for h in range(N_HEADS)])  # [H, D, hd]
    split_b = lambda b: jnp.stack(
        [b[h * hd:(h + 1) * hd].reshape(1, hd).astype(f32) for h in range(N_HEADS)])  # [H, 1, hd]
    wo_heads = jnp.stack(
        [jnp.asarray(params["out_proj_w"][:, h * hd:(h + 1) * hd].T, dtype=bf16)
         for h in range(N_HEADS)])                                                    # [H, hd, D]

    inputs = (
        audio_feature, video_feature_map,
        wt(params["w0"][:, :D]), wt(params["w0"][:, D:]),
        row(params["b0"]), row(params["bn0_g"]), row(params["bn0_b"]),
        wt(params["w1"]), row(params["b1"]),
        split_w(wq), split_w(wk), split_w(wv), split_b(bq), split_b(bk), split_b(bv),
        wo_heads, row(params["out_proj_b"]),
        wt(params["w_sv"]), row(params["b_sv"]), row(params["bn_sv_g"]), row(params["bn_sv_b"]),
        wt(params["w_cls"]), row(params["b_cls"]),
    )

    used = 3 * D + S + C
    P = ((used + LANES - 1) // LANES) * LANES               # lane-dense packed width

    vmem = pl.BlockSpec(memory_space=pltpu.MemorySpace.VMEM)
    # TODO(synk): for production shapes (large S / D) add a grid over S with a
    # BlockSpec-streamed video tile + online-softmax accumulation, mark it
    # "parallel" for the v7x dual-TC, and set vmem_limit_bytes; the toy shapes
    # here fit whole-array in VMEM so the kernel stays gridless.
    packed = pl.pallas_call(
        mnf_kernel,
        out_shape=jax.ShapeDtypeStruct((B, P), jnp.float32),
        in_specs=[vmem] * len(inputs),
        out_specs=vmem,
    )(*inputs)

    audio_w = packed[:, 0:D]
    sel_audio = packed[:, D:2 * D]
    sel_video = packed[:, 2 * D:3 * D]
    attn_w = packed[:, 3 * D:3 * D + S].reshape(B, 1, S)    # PyTorch returns [B, L=1, S]
    pred = packed[:, 3 * D + S:3 * D + S + C]

    fc_weights = [params["w0"], params["w1"]]               # module weights, unchanged
    return pred, sel_video, sel_audio, fc_weights, audio_w, attn_w


# --------------------------- pure-JAX reference ---------------------------------
# Mirrors the kernel's intended numerics (bf16 MXU operands, f32 accumulation) so
# the comparison isolates Pallas plumbing / lowering rather than dtype policy.
def mnf_reference(params, audio, video):
    hi = jax.lax.Precision.HIGHEST
    f32, bf16 = jnp.float32, jnp.bfloat16
    B, D = audio.shape
    S = video.shape[1]
    hd = D // N_HEADS

    r = lambda x: x.astype(bf16).astype(f32)                # emulate bf16 operand rounding
    mmr = lambda x, w: jnp.dot(r(x), r(w), precision=hi)

    def bn(x, g, b):
        mu = jnp.mean(x, axis=0, keepdims=True)
        var = jnp.mean((x - mu) ** 2, axis=0, keepdims=True)
        return (x - mu) / jnp.sqrt(var + EPS) * g + b

    video_mean = jnp.mean(video, axis=1)
    cat = jnp.concatenate([audio, video_mean], axis=-1)
    h = mmr(cat, params["w0"].T) + params["b0"]
    h = jax.nn.relu(bn(h, params["bn0_g"], params["bn0_b"]))
    audio_weight = jax.nn.sigmoid(mmr(h, params["w1"].T) + params["b1"])
    sel_audio = audio_weight * audio

    ipw, ipb = params["in_proj_w"], params["in_proj_b"]
    q = mmr(sel_audio, ipw[:D].T) + ipb[:D]
    k = jnp.einsum("bsd,ed->bse", r(video), r(ipw[D:2 * D]), precision=hi) + ipb[D:2 * D]
    v = jnp.einsum("bsd,ed->bse", r(video), r(ipw[2 * D:]), precision=hi) + ipb[2 * D:]
    scale = 1.0 / jnp.sqrt(jnp.float32(hd))
    outs, ws = [], []
    for hh in range(N_HEADS):
        lo, hj = hh * hd, (hh + 1) * hd
        scores = jnp.einsum("bd,bsd->bs", r(q[:, lo:hj]), r(k[:, :, lo:hj]),
                            precision=hi) * scale
        p = jax.nn.softmax(scores, axis=-1)
        ws.append(p)
        outs.append(jnp.einsum("bs,bsd->bd", r(p), r(v[:, :, lo:hj]), precision=hi))
    attn_out = mmr(jnp.concatenate(outs, axis=-1), params["out_proj_w"].T) + params["out_proj_b"]
    attn_w = sum(ws) / N_HEADS

    t = mmr(attn_out, params["w_sv"].T) + params["b_sv"]
    sel_video = jax.nn.relu(bn(t, params["bn_sv_g"], params["bn_sv_b"]))
    pred = mmr(sel_video, params["w_cls"].T) + params["b_cls"]
    return pred, sel_video, sel_audio, audio_weight, attn_w.reshape(B, 1, S)


# --------------------------- deterministic params --------------------------------
def init_params(key, aud_dim, n_classes):
    D, half = aud_dim, aud_dim // 2
    ks = iter(jax.random.split(key, 16))

    def lin(k, out_d, in_d):
        bound = 1.0 / (in_d ** 0.5)
        kw, kb = jax.random.split(k)
        return (jax.random.uniform(kw, (out_d, in_d), jnp.float32, -bound, bound),
                jax.random.uniform(kb, (out_d,), jnp.float32, -bound, bound))

    w0, b0 = lin(next(ks), half, 2 * D)
    w1, b1 = lin(next(ks), D, half)
    in_proj_w = jax.random.normal(next(ks), (3 * D, D), jnp.float32) * (1.0 / D ** 0.5)
    in_proj_b = jax.random.normal(next(ks), (3 * D,), jnp.float32) * 0.02
    out_proj_w, out_proj_b = lin(next(ks), D, D)
    w_sv, b_sv = lin(next(ks), D, D)
    w_cls, b_cls = lin(next(ks), n_classes, D)
    return dict(
        w0=w0, b0=b0, bn0_g=jnp.ones((half,), jnp.float32), bn0_b=jnp.zeros((half,), jnp.float32),
        w1=w1, b1=b1,
        in_proj_w=in_proj_w, in_proj_b=in_proj_b,
        out_proj_w=out_proj_w, out_proj_b=out_proj_b,
        w_sv=w_sv, b_sv=b_sv,
        bn_sv_g=jnp.ones((D,), jnp.float32), bn_sv_b=jnp.zeros((D,), jnp.float32),
        w_cls=w_cls, b_cls=b_cls,
    )


if __name__ == "__main__":
    B, S, D, C = 4, 8, 32, 4   # batch, video seq len, aud_dim (= embed_dim), n_classes
    key = jax.random.PRNGKey(0)
    kp, ka, kv = jax.random.split(key, 3)
    params = init_params(kp, D, C)
    audio_feature = jax.random.normal(ka, (B, D), jnp.float32)
    video_feature_map = jax.random.normal(kv, (B, S, D), jnp.float32)

    out = mnf_forward(params, audio_feature, video_feature_map)
    pred, sel_video, sel_audio, fc_weights, audio_w, attn_w = jax.block_until_ready(out)

    # Remaining kernel-vs-reference differences: MXU vs XLA accumulation order,
    # EUP exp/rsqrt/approx-reciprocal vs XLA transcendentals, amplified by the
    # training-mode BatchNorm at batch=4 — hence a slightly loose tolerance.
    ref = mnf_reference(params, audio_feature, video_feature_map)
    names = ("pred", "sel_video", "sel_audio", "audio_weight", "attn_weights")
    for name, got, want in zip(names, (pred, sel_video, sel_audio, audio_w, attn_w), ref):
        assert got.shape == want.shape, (name, got.shape, want.shape)
        assert jnp.allclose(got, want, rtol=3e-2, atol=3e-2), f"mismatch vs reference: {name}"

    print("KERNEL_OK")
</pallas_src>

<mosaic_0001>
module attributes {stable_mosaic.version = 11 : i64} {
  func.func @mnf_kernel(%arg0: memref<4x32xf32, #tpu.memory_space<vmem>>, %arg1: memref<4x8x32xf32, #tpu.memory_space<vmem>>, %arg2: memref<32x16xbf16, #tpu.memory_space<vmem>>, %arg3: memref<32x16xbf16, #tpu.memory_space<vmem>>, %arg4: memref<1x16xf32, #tpu.memory_space<vmem>>, %arg5: memref<1x16xf32, #tpu.memory_space<vmem>>, %arg6: memref<1x16xf32, #tpu.memory_space<vmem>>, %arg7: memref<16x32xbf16, #tpu.memory_space<vmem>>, %arg8: memref<1x32xf32, #tpu.memory_space<vmem>>, %arg9: memref<2x32x16xbf16, #tpu.memory_space<vmem>>, %arg10: memref<2x32x16xbf16, #tpu.memory_space<vmem>>, %arg11: memref<2x32x16xbf16, #tpu.memory_space<vmem>>, %arg12: memref<2x1x16xf32, #tpu.memory_space<vmem>>, %arg13: memref<2x1x16xf32, #tpu.memory_space<vmem>>, %arg14: memref<2x1x16xf32, #tpu.memory_space<vmem>>, %arg15: memref<2x16x32xbf16, #tpu.memory_space<vmem>>, %arg16: memref<1x32xf32, #tpu.memory_space<vmem>>, %arg17: memref<32x32xbf16, #tpu.memory_space<vmem>>, %arg18: memref<1x32xf32, #tpu.memory_space<vmem>>, %arg19: memref<1x32xf32, #tpu.memory_space<vmem>>, %arg20: memref<1x32xf32, #tpu.memory_space<vmem>>, %arg21: memref<32x4xbf16, #tpu.memory_space<vmem>>, %arg22: memref<1x4xf32, #tpu.memory_space<vmem>>, %arg23: memref<4x128xf32, #tpu.memory_space<vmem>>) attributes {dimension_semantics = [], scalar_prefetch = 0 : i64, scratch_operands = 0 : i64, tpu.core_type = #tpu.core_type<tc>} {
    %c0 = arith.constant 0 : index
    %c0_0 = arith.constant 0 : index
    %0 = vector.load %arg0[%c0, %c0_0] : memref<4x32xf32, #tpu.memory_space<vmem>>, vector<4x32xf32>
    %c0_1 = arith.constant 0 : index
    %c0_2 = arith.constant 0 : index
    %c0_3 = arith.constant 0 : index
    %1 = vector.load %arg1[%c0_1, %c0_2, %c0_3] : memref<4x8x32xf32, #tpu.memory_space<vmem>>, vector<4x8x32xf32>
    %cst = arith.constant dense<0.000000e+00> : vector<4x32xf32>
    %2 = vector.multi_reduction <add>, %1, %cst [1] : vector<4x8x32xf32> to vector<4x32xf32>
    %cst_4 = arith.constant 8.000000e+00 : f32
    %3 = vector.broadcast %cst_4 : f32 to vector<4x32xf32>
    %4 = arith.divf %2, %3 : vector<4x32xf32>
    %c0_5 = arith.constant 0 : index
    %c0_6 = arith.constant 0 : index
    %5 = vector.load %arg2[%c0_5, %c0_6] : memref<32x16xbf16, #tpu.memory_space<vmem>>, vector<32x16xbf16>
    %6 = arith.truncf %0 : vector<4x32xf32> to vector<4x32xbf16>
    %cst_7 = arith.constant dense<0.000000e+00> : vector<4x16xf32>
    %7 = tpu.matmul %6, %5, %cst_7 {dimension_numbers = #tpu.dot_dimension_numbers<[1], [0], [0], [1], [0, 0, 1, 1], [], []>} : vector<4x32xbf16>, vector<32x16xbf16>, vector<4x16xf32> -> vector<4x16xf32>
    %c0_8 = arith.constant 0 : index
    %c0_9 = arith.constant 0 : index
    %8 = vector.load %arg3[%c0_8, %c0_9] : memref<32x16xbf16, #tpu.memory_space<vmem>>, vector<32x16xbf16>
    %9 = arith.truncf %4 : vector<4x32xf32> to vector<4x32xbf16>
    %cst_10 = arith.constant dense<0.000000e+00> : vector<4x16xf32>
    %10 = tpu.matmul %9, %8, %cst_10 {dimension_numbers = #tpu.dot_dimension_numbers<[1], [0], [0], [1], [0, 0, 1, 1], [], []>} : vector<4x32xbf16>, vector<32x16xbf16>, vector<4x16xf32> -> vector<4x16xf32>
    %11 = arith.addf %7, %10 : vector<4x16xf32>
    %c0_11 = arith.constant 0 : index
    %c0_12 = arith.constant 0 : index
    %12 = vector.load %arg4[%c0_11, %c0_12] : memref<1x16xf32, #tpu.memory_space<vmem>>, vector<1x16xf32>
    %13 = vector.broadcast %12 : vector<1x16xf32> to vector<4x16xf32>
    %14 = arith.addf %11, %13 : vector<4x16xf32>
    %cst_13 = arith.constant dense<0.000000e+00> : vector<16xf32>
    %15 = vector.multi_reduction <add>, %14, %cst_13 [0] : vector<4x16xf32> to vector<16xf32>
    %16 = vector.shape_cast %15 : vector<16xf32> to vector<1x16xf32>
    %cst_14 = arith.constant 4.000000e+00 : f32
    %17 = vector.broadcast %cst_14 : f32 to vector<1x16xf32>
    %18 = arith.divf %16, %17 : vector<1x16xf32>
    %19 = vector.broadcast %18 : vector<1x16xf32> to vector<4x16xf32>
    %20 = arith.subf %14, %19 : vector<4x16xf32>
    %21 = arith.mulf %20, %20 : vector<4x16xf32>
    %cst_15 = arith.constant dense<0.000000e+00> : vector<16xf32>
    %22 = vector.multi_reduction <add>, %21, %cst_15 [0] : vector<4x16xf32> to vector<16xf32>
    %23 = vector.shape_cast %22 : vector<16xf32> to vector<1x16xf32>
    %cst_16 = arith.constant 4.000000e+00 : f32
    %24 = vector.broadcast %cst_16 : f32 to vector<1x16xf32>
    %25 = arith.divf %23, %24 : vector<1x16xf32>
    %26 = vector.broadcast %18 : vector<1x16xf32> to vector<4x16xf32>
    %27 = arith.subf %14, %26 : vector<4x16xf32>
    %cst_17 = arith.constant 9.99999974E-6 : f32
    %28 = vector.broadcast %cst_17 : f32 to vector<1x16xf32>
    %29 = arith.addf %25, %28 : vector<1x16xf32>
    %30 = math.rsqrt %29 : vector<1x16xf32>
    %31 = vector.broadcast %30 : vector<1x16xf32> to vector<4x16xf32>
    %32 = arith.mulf %27, %31 : vector<4x16xf32>
    %c0_18 = arith.constant 0 : index
    %c0_19 = arith.constant 0 : index
    %33 = vector.load %arg5[%c0_18, %c0_19] : memref<1x16xf32, #tpu.memory_space<vmem>>, vector<1x16xf32>
    %34 = vector.broadcast %33 : vector<1x16xf32> to vector<4x16xf32>
    %35 = arith.mulf %32, %34 : vector<4x16xf32>
    %c0_20 = arith.constant 0 : index
    %c0_21 = arith.constant 0 : index
    %36 = vector.load %arg6[%c0_20, %c0_21] : memref<1x16xf32, #tpu.memory_space<vmem>>, vector<1x16xf32>
    %37 = vector.broadcast %36 : vector<1x16xf32> to vector<4x16xf32>
    %38 = arith.addf %35, %37 : vector<4x16xf32>
    %cst_22 = arith.constant 0.000000e+00 : f32
    %39 = vector.broadcast %cst_22 : f32 to vector<4x16xf32>
    %40 = arith.maximumf %38, %39 : vector<4x16xf32>
    %c0_23 = arith.constant 0 : index
    %c0_24 = arith.constant 0 : index
    %41 = vector.load %arg7[%c0_23, %c0_24] : memref<16x32xbf16, #tpu.memory_space<vmem>>, vector<16x32xbf16>
    %42 = arith.truncf %40 : vector<4x16xf32> to vector<4x16xbf16>
    %cst_25 = arith.constant dense<0.000000e+00> : vector<4x32xf32>
    %43 = tpu.matmul %42, %41, %cst_25 {dimension_numbers = #tpu.dot_dimension_numbers<[1], [0], [0], [1], [0, 0, 1, 1], [], []>} : vector<4x16xbf16>, vector<16x32xbf16>, vector<4x32xf32> -> vector<4x32xf32>
    %c0_26 = arith.constant 0 : index
    %c0_27 = arith.constant 0 : index
    %44 = vector.load %arg8[%c0_26, %c0_27] : memref<1x32xf32, #tpu.memory_space<vmem>>, vector<1x32xf32>
    %45 = vector.broadcast %44 : vector<1x32xf32> to vector<4x32xf32>
    %46 = arith.addf %43, %45 : vector<4x32xf32>
    %47 = arith.negf %46 : vector<4x32xf32>
    %48 = math.exp %47 : vector<4x32xf32>
    %cst_28 = arith.constant 1.000000e+00 : f32
    %49 = vector.broadcast %cst_28 : f32 to vector<4x32xf32>
    %50 = arith.addf %49, %48 : vector<4x32xf32>
    %51 = arith.divf %49, %50 : vector<4x32xf32>
    %52 = arith.mulf %51, %0 : vector<4x32xf32>
    %53 = arith.truncf %52 : vector<4x32xf32> to vector<4x32xbf16>
    %54 = vector.shape_cast %1 : vector<4x8x32xf32> to vector<32x32xf32>
    %55 = arith.truncf %54 : vector<32x32xf32> to vector<32x32xbf16>
    %cst_29 = arith.constant 1.600000e+01 : f32
    %56 = math.sqrt %cst_29 : f32
    %cst_30 = arith.constant 1.000000e+00 : f32
    %57 = arith.divf %cst_30, %56 : f32
    %cst_31 = arith.constant 0.000000e+00 : f32
    %58 = vector.broadcast %cst_31 : f32 to vector<4x32xf32>
    %cst_32 = arith.constant 0.000000e+00 : f32
    %59 = vector.broadcast %cst_32 : f32 to vector<4x8xf32>
    %c0_33 = arith.constant 0 : index
    %c0_34 = arith.constant 0 : index
    %c0_35 = arith.constant 0 : index
    %60 = vector.load %arg9[%c0_33, %c0_34, %c0_35] : memref<2x32x16xbf16, #tpu.memory_space<vmem>>, vector<1x32x16xbf16>
    %61 = vector.shape_cast %60 : vector<1x32x16xbf16> to vector<32x16xbf16>
    %cst_36 = arith.constant dense<0.000000e+00> : vector<4x16xf32>
    %62 = tpu.matmul %53, %61, %cst_36 {dimension_numbers = #tpu.dot_dimension_numbers<[1], [0], [0], [1], [0, 0, 1, 1], [], []>} : vector<4x32xbf16>, vector<32x16xbf16>, vector<4x16xf32> -> vector<4x16xf32>
    %c0_37 = arith.constant 0 : index
    %c0_38 = arith.constant 0 : index
    %c0_39 = arith.constant 0 : index
    %63 = vector.load %arg12[%c0_37, %c0_38, %c0_39] : memref<2x1x16xf32, #tpu.memory_space<vmem>>, vector<1x1x16xf32>
    %64 = vector.shape_cast %63 : vector<1x1x16xf32> to vector<1x16xf32>
    %65 = vector.broadcast %64 : vector<1x16xf32> to vector<4x16xf32>
    %66 = arith.addf %62, %65 : vector<4x16xf32>
    %67 = vector.shape_cast %66 : vector<4x16xf32> to vector<4x1x16xf32>
    %c0_40 = arith.constant 0 : index
    %c0_41 = arith.constant 0 : index
    %c0_42 = arith.constant 0 : index
    %68 = vector.load %arg10[%c0_40, %c0_41, %c0_42] : memref<2x32x16xbf16, #tpu.memory_space<vmem>>, vector<1x32x16xbf16>
    %69 = vector.shape_cast %68 : vector<1x32x16xbf16> to vector<32x16xbf16>
    %cst_43 = arith.constant dense<0.000000e+00> : vector<32x16xf32>
    %70 = tpu.matmul %55, %69, %cst_43 {dimension_numbers = #tpu.dot_dimension_numbers<[1], [0], [0], [1], [0, 0, 1, 1], [], []>} : vector<32x32xbf16>, vector<32x16xbf16>, vector<32x16xf32> -> vector<32x16xf32>
    %c0_44 = arith.constant 0 : index
    %c0_45 = arith.constant 0 : index
    %c0_46 = arith.constant 0 : index
    %71 = vector.load %arg13[%c0_44, %c0_45, %c0_46] : memref<2x1x16xf32, #tpu.memory_space<vmem>>, vector<1x1x16xf32>
    %72 = vector.shape_cast %71 : vector<1x1x16xf32> to vector<1x16xf32>
    %73 = vector.broadcast %72 : vector<1x16xf32> to vector<32x16xf32>
    %74 = arith.addf %70, %73 : vector<32x16xf32>
    %75 = vector.shape_cast %74 : vector<32x16xf32> to vector<4x8x16xf32>
    %c0_47 = arith.constant 0 : index
    %c0_48 = arith.constant 0 : index
    %c0_49 = arith.constant 0 : index
    %76 = vector.load %arg11[%c0_47, %c0_48, %c0_49] : memref<2x32x16xbf16, #tpu.memory_space<vmem>>, vector<1x32x16xbf16>
    %77 = vector.shape_cast %76 : vector<1x32x16xbf16> to vector<32x16xbf16>
    %cst_50 = arith.constant dense<0.000000e+00> : vector<32x16xf32>
    %78 = tpu.matmul %55, %77, %cst_50 {dimension_numbers = #tpu.dot_dimension_numbers<[1], [0], [0], [1], [0, 0, 1, 1], [], []>} : vector<32x32xbf16>, vector<32x16xbf16>, vector<32x16xf32> -> vector<32x16xf32>
    %c0_51 = arith.constant 0 : index
    %c0_52 = arith.constant 0 : index
    %c0_53 = arith.constant 0 : index
    %79 = vector.load %arg14[%c0_51, %c0_52, %c0_53] : memref<2x1x16xf32, #tpu.memory_space<vmem>>, vector<1x1x16xf32>
    %80 = vector.shape_cast %79 : vector<1x1x16xf32> to vector<1x16xf32>
    %81 = vector.broadcast %80 : vector<1x16xf32> to vector<32x16xf32>
    %82 = arith.addf %78, %81 : vector<32x16xf32>
    %83 = vector.shape_cast %82 : vector<32x16xf32> to vector<4x8x16xf32>
    %84 = arith.truncf %67 : vector<4x1x16xf32> to vector<4x1x16xbf16>
    %85 = arith.truncf %75 : vector<4x8x16xf32> to vector<4x8x16xbf16>
    "tpu.trace_start"() <{level = 10 : i32, message = "bqd,bkd->bqk"}> : () -> ()
    %cst_54 = arith.constant dense<0.000000e+00> : vector<4x1x8xf32>
    %86 = tpu.matmul %84, %85, %cst_54 {dimension_numbers = #tpu.dot_dimension_numbers<[2], [2], [1], [1], [0, 0, 0, 1, 1, 1], [0], [0]>} : vector<4x1x16xbf16>, vector<4x8x16xbf16>, vector<4x1x8xf32> -> vector<4x1x8xf32>
    "tpu.trace_stop"() : () -> ()
    %87 = vector.broadcast %57 : f32 to vector<4x1x8xf32>
    %88 = arith.mulf %86, %87 : vector<4x1x8xf32>
    %cst_55 = arith.constant dense<0xFF800000> : vector<4x1xf32>
    %89 = vector.multi_reduction <maximumf>, %88, %cst_55 [2] : vector<4x1x8xf32> to vector<4x1xf32>
    %90 = vector.shape_cast %89 : vector<4x1xf32> to vector<4x1x1xf32>
    %91 = vector.broadcast %90 : vector<4x1x1xf32> to vector<4x1x8xf32>
    %92 = arith.subf %88, %91 : vector<4x1x8xf32>
    %93 = math.exp %92 : vector<4x1x8xf32>
    %cst_56 = arith.constant dense<0.000000e+00> : vector<4x1xf32>
    %94 = vector.multi_reduction <add>, %93, %cst_56 [2] : vector<4x1x8xf32> to vector<4x1xf32>
    %95 = vector.shape_cast %94 : vector<4x1xf32> to vector<4x1x1xf32>
    %96 = tpu.reciprocal %95 {approx = true} : vector<4x1x1xf32> -> vector<4x1x1xf32>
    %97 = vector.broadcast %96 : vector<4x1x1xf32> to vector<4x1x8xf32>
    %98 = arith.mulf %93, %97 : vector<4x1x8xf32>
    %99 = vector.shape_cast %98 : vector<4x1x8xf32> to vector<4x8xf32>
    %100 = arith.addf %59, %99 : vector<4x8xf32>
    %101 = arith.truncf %98 : vector<4x1x8xf32> to vector<4x1x8xbf16>
    %102 = arith.truncf %83 : vector<4x8x16xf32> to vector<4x8x16xbf16>
    "tpu.trace_start"() <{level = 10 : i32, message = "bqk,bkd->bqd"}> : () -> ()
    %cst_57 = arith.constant dense<0.000000e+00> : vector<4x1x16xf32>
    %103 = tpu.matmul %101, %102, %cst_57 {dimension_numbers = #tpu.dot_dimension_numbers<[2], [1], [1], [2], [0, 0, 0, 1, 1, 2], [0], [0]>} : vector<4x1x8xbf16>, vector<4x8x16xbf16>, vector<4x1x16xf32> -> vector<4x1x16xf32>
    "tpu.trace_stop"() : () -> ()
    %104 = vector.shape_cast %103 : vector<4x1x16xf32> to vector<4x16xf32>
    %c0_58 = arith.constant 0 : index
    %c0_59 = arith.constant 0 : index
    %c0_60 = arith.constant 0 : index
    %105 = vector.load %arg15[%c0_58, %c0_59, %c0_60] : memref<2x16x32xbf16, #tpu.memory_space<vmem>>, vector<1x16x32xbf16>
    %106 = vector.shape_cast %105 : vector<1x16x32xbf16> to vector<16x32xbf16>
    %107 = arith.truncf %104 : vector<4x16xf32> to vector<4x16xbf16>
    %cst_61 = arith.constant dense<0.000000e+00> : vector<4x32xf32>
    %108 = tpu.matmul %107, %106, %cst_61 {dimension_numbers = #tpu.dot_dimension_numbers<[1], [0], [0], [1], [0, 0, 1, 1], [], []>} : vector<4x16xbf16>, vector<16x32xbf16>, vector<4x32xf32> -> vector<4x32xf32>
    %109 = arith.addf %58, %108 : vector<4x32xf32>
    %c1 = arith.constant 1 : index
    %c0_62 = arith.constant 0 : index
    %c0_63 = arith.constant 0 : index
    %110 = vector.load %arg9[%c1, %c0_62, %c0_63] : memref<2x32x16xbf16, #tpu.memory_space<vmem>>, vector<1x32x16xbf16>
    %111 = vector.shape_cast %110 : vector<1x32x16xbf16> to vector<32x16xbf16>
    %cst_64 = arith.constant dense<0.000000e+00> : vector<4x16xf32>
    %112 = tpu.matmul %53, %111, %cst_64 {dimension_numbers = #tpu.dot_dimension_numbers<[1], [0], [0], [1], [0, 0, 1, 1], [], []>} : vector<4x32xbf16>, vector<32x16xbf16>, vector<4x16xf32> -> vector<4x16xf32>
    %c1_65 = arith.constant 1 : index
    %c0_66 = arith.constant 0 : index
    %c0_67 = arith.constant 0 : index
    %113 = vector.load %arg12[%c1_65, %c0_66, %c0_67] : memref<2x1x16xf32, #tpu.memory_space<vmem>>, vector<1x1x16xf32>
    %114 = vector.shape_cast %113 : vector<1x1x16xf32> to vector<1x16xf32>
    %115 = vector.broadcast %114 : vector<1x16xf32> to vector<4x16xf32>
    %116 = arith.addf %112, %115 : vector<4x16xf32>
    %117 = vector.shape_cast %116 : vector<4x16xf32> to vector<4x1x16xf32>
    %c1_68 = arith.constant 1 : index
    %c0_69 = arith.constant 0 : index
    %c0_70 = arith.constant 0 : index
    %118 = vector.load %arg10[%c1_68, %c0_69, %c0_70] : memref<2x32x16xbf16, #tpu.memory_space<vmem>>, vector<1x32x16xbf16>
    %119 = vector.shape_cast %118 : vector<1x32x16xbf16> to vector<32x16xbf16>
    %cst_71 = arith.constant dense<0.000000e+00> : vector<32x16xf32>
    %120 = tpu.matmul %55, %119, %cst_71 {dimension_numbers = #tpu.dot_dimension_numbers<[1], [0], [0], [1], [0, 0, 1, 1], [], []>} : vector<32x32xbf16>, vector<32x16xbf16>, vector<32x16xf32> -> vector<32x16xf32>
    %c1_72 = arith.constant 1 : index
    %c0_73 = arith.constant 0 : index
    %c0_74 = arith.constant 0 : index
    %121 = vector.load %arg13[%c1_72, %c0_73, %c0_74] : memref<2x1x16xf32, #tpu.memory_space<vmem>>, vector<1x1x16xf32>
    %122 = vector.shape_cast %121 : vector<1x1x16xf32> to vector<1x16xf32>
    %123 = vector.broadcast %122 : vector<1x16xf32> to vector<32x16xf32>
    %124 = arith.addf %120, %123 : vector<32x16xf32>
    %125 = vector.shape_cast %124 : vector<32x16xf32> to vector<4x8x16xf32>
    %c1_75 = arith.constant 1 : index
    %c0_76 = arith.constant 0 : index
    %c0_77 = arith.constant 0 : index
    %126 = vector.load %arg11[%c1_75, %c0_76, %c0_77] : memref<2x32x16xbf16, #tpu.memory_space<vmem>>, vector<1x32x16xbf16>
    %127 = vector.shape_cast %126 : vector<1x32x16xbf16> to vector<32x16xbf16>
    %cst_78 = arith.constant dense<0.000000e+00> : vector<32x16xf32>
    %128 = tpu.matmul %55, %127, %cst_78 {dimension_numbers = #tpu.dot_dimension_numbers<[1], [0], [0], [1], [0, 0, 1, 1], [], []>} : vector<32x32xbf16>, vector<32x16xbf16>, vector<32x16xf32> -> vector<32x16xf32>
    %c1_79 = arith.constant 1 : index
    %c0_80 = arith.constant 0 : index
    %c0_81 = arith.constant 0 : index
    %129 = vector.load %arg14[%c1_79, %c0_80, %c0_81] : memref<2x1x16xf32, #tpu.memory_space<vmem>>, vector<1x1x16xf32>
    %130 = vector.shape_cast %129 : vector<1x1x16xf32> to vector<1x16xf32>
    %131 = vector.broadcast %130 : vector<1x16xf32> to vector<32x16xf32>
    %132 = arith.addf %128, %131 : vector<32x16xf32>
    %133 = vector.shape_cast %132 : vector<32x16xf32> to vector<4x8x16xf32>
    %134 = arith.truncf %117 : vector<4x1x16xf32> to vector<4x1x16xbf16>
    %135 = arith.truncf %125 : vector<4x8x16xf32> to vector<4x8x16xbf16>
    "tpu.trace_start"() <{level = 10 : i32, message = "bqd,bkd->bqk"}> : () -> ()
    %cst_82 = arith.constant dense<0.000000e+00> : vector<4x1x8xf32>
    %136 = tpu.matmul %134, %135, %cst_82 {dimension_numbers = #tpu.dot_dimension_numbers<[2], [2], [1], [1], [0, 0, 0, 1, 1, 1], [0], [0]>} : vector<4x1x16xbf16>, vector<4x8x16xbf16>, vector<4x1x8xf32> -> vector<4x1x8xf32>
    "tpu.trace_stop"() : () -> ()
    %137 = vector.broadcast %57 : f32 to vector<4x1x8xf32>
    %138 = arith.mulf %136, %137 : vector<4x1x8xf32>
    %cst_83 = arith.constant dense<0xFF800000> : vector<4x1xf32>
    %139 = vector.multi_reduction <maximumf>, %138, %cst_83 [2] : vector<4x1x8xf32> to vector<4x1xf32>
    %140 = vector.shape_cast %139 : vector<4x1xf32> to vector<4x1x1xf32>
    %141 = vector.broadcast %140 : vector<4x1x1xf32> to vector<4x1x8xf32>
    %142 = arith.subf %138, %141 : vector<4x1x8xf32>
    %143 = math.exp %142 : vector<4x1x8xf32>
    %cst_84 = arith.constant dense<0.000000e+00> : vector<4x1xf32>
    %144 = vector.multi_reduction <add>, %143, %cst_84 [2] : vector<4x1x8xf32> to vector<4x1xf32>
    %145 = vector.shape_cast %144 : vector<4x1xf32> to vector<4x1x1xf32>
    %146 = tpu.reciprocal %145 {approx = true} : vector<4x1x1xf32> -> vector<4x1x1xf32>
    %147 = vector.broadcast %146 : vector<4x1x1xf32> to vector<4x1x8xf32>
    %148 = arith.mulf %143, %147 : vector<4x1x8xf32>
    %149 = vector.shape_cast %148 : vector<4x1x8xf32> to vector<4x8xf32>
    %150 = arith.addf %100, %149 : vector<4x8xf32>
    %151 = arith.truncf %148 : vector<4x1x8xf32> to vector<4x1x8xbf16>
    %152 = arith.truncf %133 : vector<4x8x16xf32> to vector<4x8x16xbf16>
    "tpu.trace_start"() <{level = 10 : i32, message = "bqk,bkd->bqd"}> : () -> ()
    %cst_85 = arith.constant dense<0.000000e+00> : vector<4x1x16xf32>
    %153 = tpu.matmul %151, %152, %cst_85 {dimension_numbers = #tpu.dot_dimension_numbers<[2], [1], [1], [2], [0, 0, 0, 1, 1, 2], [0], [0]>} : vector<4x1x8xbf16>, vector<4x8x16xbf16>, vector<4x1x16xf32> -> vector<4x1x16xf32>
    "tpu.trace_stop"() : () -> ()
    %154 = vector.shape_cast %153 : vector<4x1x16xf32> to vector<4x16xf32>
    %c1_86 = arith.constant 1 : index
    %c0_87 = arith.constant 0 : index
    %c0_88 = arith.constant 0 : index
    %155 = vector.load %arg15[%c1_86, %c0_87, %c0_88] : memref<2x16x32xbf16, #tpu.memory_space<vmem>>, vector<1x16x32xbf16>
    %156 = vector.shape_cast %155 : vector<1x16x32xbf16> to vector<16x32xbf16>
    %157 = arith.truncf %154 : vector<4x16xf32> to vector<4x16xbf16>
    %cst_89 = arith.constant dense<0.000000e+00> : vector<4x32xf32>
    %158 = tpu.matmul %157, %156, %cst_89 {dimension_numbers = #tpu.dot_dimension_numbers<[1], [0], [0], [1], [0, 0, 1, 1], [], []>} : vector<4x16xbf16>, vector<16x32xbf16>, vector<4x32xf32> -> vector<4x32xf32>
    %159 = arith.addf %109, %158 : vector<4x32xf32>
    %c0_90 = arith.constant 0 : index
    %c0_91 = arith.constant 0 : index
    %160 = vector.load %arg16[%c0_90, %c0_91] : memref<1x32xf32, #tpu.memory_space<vmem>>, vector<1x32xf32>
    %161 = vector.broadcast %160 : vector<1x32xf32> to vector<4x32xf32>
    %162 = arith.addf %159, %161 : vector<4x32xf32>
    %cst_92 = arith.constant 5.000000e-01 : f32
    %163 = vector.broadcast %cst_92 : f32 to vector<4x8xf32>
    %164 = arith.mulf %150, %163 : vector<4x8xf32>
    %c0_93 = arith.constant 0 : index
    %c0_94 = arith.constant 0 : index
    %165 = vector.load %arg17[%c0_93, %c0_94] : memref<32x32xbf16, #tpu.memory_space<vmem>>, vector<32x32xbf16>
    %166 = arith.truncf %162 : vector<4x32xf32> to vector<4x32xbf16>
    %cst_95 = arith.constant dense<0.000000e+00> : vector<4x32xf32>
    %167 = tpu.matmul %166, %165, %cst_95 {dimension_numbers = #tpu.dot_dimension_numbers<[1], [0], [0], [1], [0, 0, 1, 1], [], []>} : vector<4x32xbf16>, vector<32x32xbf16>, vector<4x32xf32> -> vector<4x32xf32>
    %c0_96 = arith.constant 0 : index
    %c0_97 = arith.constant 0 : index
    %168 = vector.load %arg18[%c0_96, %c0_97] : memref<1x32xf32, #tpu.memory_space<vmem>>, vector<1x32xf32>
    %169 = vector.broadcast %168 : vector<1x32xf32> to vector<4x32xf32>
    %170 = arith.addf %167, %169 : vector<4x32xf32>
    %cst_98 = arith.constant dense<0.000000e+00> : vector<32xf32>
    %171 = vector.multi_reduction <add>, %170, %cst_98 [0] : vector<4x32xf32> to vector<32xf32>
    %172 = vector.shape_cast %171 : vector<32xf32> to vector<1x32xf32>
    %cst_99 = arith.constant 4.000000e+00 : f32
    %173 = vector.broadcast %cst_99 : f32 to vector<1x32xf32>
    %174 = arith.divf %172, %173 : vector<1x32xf32>
    %175 = vector.broadcast %174 : vector<1x32xf32> to vector<4x32xf32>
    %176 = arith.subf %170, %175 : vector<4x32xf32>
    %177 = arith.mulf %176, %176 : vector<4x32xf32>
    %cst_100 = arith.constant dense<0.000000e+00> : vector<32xf32>
    %178 = vector.multi_reduction <add>, %177, %cst_100 [0] : vector<4x32xf32> to vector<32xf32>
    %179 = vector.shape_cast %178 : vector<32xf32> to vector<1x32xf32>
    %cst_101 = arith.constant 4.000000e+00 : f32
    %180 = vector.broadcast %cst_101 : f32 to vector<1x32xf32>
    %181 = arith.divf %179, %180 : vector<1x32xf32>
    %182 = vector.broadcast %174 : vector<1x32xf32> to vector<4x32xf32>
    %183 = arith.subf %170, %182 : vector<4x32xf32>
    %cst_102 = arith.constant 9.99999974E-6 : f32
    %184 = vector.broadcast %cst_102 : f32 to vector<1x32xf32>
    %185 = arith.addf %181, %184 : vector<1x32xf32>
    %186 = math.rsqrt %185 : vector<1x32xf32>
    %187 = vector.broadcast %186 : vector<1x32xf32> to vector<4x32xf32>
    %188 = arith.mulf %183, %187 : vector<4x32xf32>
    %c0_103 = arith.constant 0 : index
    %c0_104 = arith.constant 0 : index
    %189 = vector.load %arg19[%c0_103, %c0_104] : memref<1x32xf32, #tpu.memory_space<vmem>>, vector<1x32xf32>
    %190 = vector.broadcast %189 : vector<1x32xf32> to vector<4x32xf32>
    %191 = arith.mulf %188, %190 : vector<4x32xf32>
    %c0_105 = arith.constant 0 : index
    %c0_106 = arith.constant 0 : index
    %192 = vector.load %arg20[%c0_105, %c0_106] : memref<1x32xf32, #tpu.memory_space<vmem>>, vector<1x32xf32>
    %193 = vector.broadcast %192 : vector<1x32xf32> to vector<4x32xf32>
    %194 = arith.addf %191, %193 : vector<4x32xf32>
    %cst_107 = arith.constant 0.000000e+00 : f32
    %195 = vector.broadcast %cst_107 : f32 to vector<4x32xf32>
    %196 = arith.maximumf %194, %195 : vector<4x32xf32>
    %c0_108 = arith.constant 0 : index
    %c0_109 = arith.constant 0 : index
    %197 = vector.load %arg21[%c0_108, %c0_109] : memref<32x4xbf16, #tpu.memory_space<vmem>>, vector<32x4xbf16>
    %198 = arith.truncf %196 : vector<4x32xf32> to vector<4x32xbf16>
    %cst_110 = arith.constant dense<0.000000e+00> : vector<4x4xf32>
    %199 = tpu.matmul %198, %197, %cst_110 {dimension_numbers = #tpu.dot_dimension_numbers<[1], [0], [0], [1], [0, 0, 1, 1], [], []>} : vector<4x32xbf16>, vector<32x4xbf16>, vector<4x4xf32> -> vector<4x4xf32>
    %c0_111 = arith.constant 0 : index
    %c0_112 = arith.constant 0 : index
    %200 = vector.load %arg22[%c0_111, %c0_112] : memref<1x4xf32, #tpu.memory_space<vmem>>, vector<1x4xf32>
    %201 = vector.broadcast %200 : vector<1x4xf32> to vector<4x4xf32>
    %202 = arith.addf %199, %201 : vector<4x4xf32>
    %cst_113 = arith.constant 0.000000e+00 : f32
    %203 = vector.broadcast %cst_113 : f32 to vector<4x20xf32>
    %204 = tpu.concatenate %51, %52, %196, %164, %202, %203 in 1 : vector<4x32xf32>, vector<4x32xf32>, vector<4x32xf32>, vector<4x8xf32>, vector<4x4xf32>, vector<4x20xf32> -> vector<4x128xf32>
    %c0_114 = arith.constant 0 : index
    %c0_115 = arith.constant 0 : index
    %205 = vector.load %arg23[%c0_114, %c0_115] : memref<4x128xf32, #tpu.memory_space<vmem>>, vector<4x128xf32>
    tpu.vector_store %arg23[%c0_114, %c0_115], %204 {strides = array<i32>} : memref<4x128xf32, #tpu.memory_space<vmem>>, vector<4x128xf32>,
    return
  }
}

</mosaic_0001>

<llo_original>
// kernel: tpu_custom_call.1
$region0: #{tpu_custom_call.1}
  #allocation0 [shape = 'u32[]', space=smem, size = 0x4, offset = 0x4, fixed_abs, tag = 'smem constant byte address 0x4 - core index']
  #allocation1 [shape = 'u32[144,128]{1,0:T(1,128)}', space=vmem, size = 0x12000, scoped, tag = 'internal scratch']
  %s0 = inlined_call_operand.vmem [shape: f32[4,32], index: 0, kind: input, shape index: {}]
  %s1 = inlined_call_operand.vmem [shape: f32[4,8,32], index: 1, kind: input, shape index: {}]
  %s2 = inlined_call_operand.vmem [shape: bf16[32,16], index: 2, kind: input, shape index: {}]
  %s3 = inlined_call_operand.vmem [shape: bf16[32,16], index: 3, kind: input, shape index: {}]
  %s4 = inlined_call_operand.vmem [shape: f32[1,16], index: 4, kind: input, shape index: {}]
  %s5 = inlined_call_operand.vmem [shape: f32[1,16], index: 5, kind: input, shape index: {}]
  %s6 = inlined_call_operand.vmem [shape: f32[1,16], index: 6, kind: input, shape index: {}]
  %s7 = inlined_call_operand.vmem [shape: bf16[16,32], index: 7, kind: input, shape index: {}]
  %s8 = inlined_call_operand.vmem [shape: f32[1,32], index: 8, kind: input, shape index: {}]
  %s9 = inlined_call_operand.vmem [shape: bf16[2,32,16], index: 9, kind: input, shape index: {}]
  %s10 = inlined_call_operand.vmem [shape: bf16[2,32,16], index: 10, kind: input, shape index: {}]
  %s11 = inlined_call_operand.vmem [shape: bf16[2,32,16], index: 11, kind: input, shape index: {}]
  %s12 = inlined_call_operand.vmem [shape: f32[2,1,16], index: 12, kind: input, shape index: {}]
  %s13 = inlined_call_operand.vmem [shape: f32[2,1,16], index: 13, kind: input, shape index: {}]
  %s14 = inlined_call_operand.vmem [shape: f32[2,1,16], index: 14, kind: input, shape index: {}]
  %s15 = inlined_call_operand.vmem [shape: bf16[2,16,32], index: 15, kind: input, shape index: {}]
  %s16 = inlined_call_operand.vmem [shape: f32[1,32], index: 16, kind: input, shape index: {}]
  %s17 = inlined_call_operand.vmem [shape: bf16[32,32], index: 17, kind: input, shape index: {}]
  %s18 = inlined_call_operand.vmem [shape: f32[1,32], index: 18, kind: input, shape index: {}]
  %s19 = inlined_call_operand.vmem [shape: f32[1,32], index: 19, kind: input, shape index: {}]
  %s20 = inlined_call_operand.vmem [shape: f32[1,32], index: 20, kind: input, shape index: {}]
  %s21 = inlined_call_operand.vmem [shape: bf16[32,4], index: 21, kind: input, shape index: {}]
  %s22 = inlined_call_operand.vmem [shape: f32[1,4], index: 22, kind: input, shape index: {}]
  %s23 = inlined_call_operand.hbm [shape: f32[4,128], index: 23, kind: output, shape index: {}]
  %s24 = sld [smem:[#allocation0]]
  $region102: #{tpu_custom_call.1} parent=0
    _
  %s26 = ssub.s32 1, %s24
  %s27 = scalar_select 0, %s26, %s24
  $region1: #{tpu_custom_call.1} parent=0
    #allocation2 [shape = 'u8[2048]{0}', space=vmem, size = 0x800, scoped, tag = 'output window, operand 0, single buffered']
    #allocation3 [shape = 's32[1]{0}', space=sflag, size = 0x4, scoped, tag = 'scoped memory for tpu_custom_call.1']
    %28 = vsyncpa [#allocation3], 0
    // Predicated region
    $region2: #{tpu_custom_call.1} parent=1 // pred_check
      _
    $region3: #{tpu_custom_call.1} parent=1 // pred_check_branch
      %30 = sbr.rel (0) target = $region5
    $region4: #{tpu_custom_call.1} parent=1 // pred_region
      _
    $region5: #{tpu_custom_call.1} parent=1 // pred_fallthru
      _
    // Predicated region
    $region6: #{tpu_custom_call.1} parent=1 // pred_check
      _
    $region7: #{tpu_custom_call.1} parent=1 // pred_check_branch
      %32 = sbr.rel (0) target = $region9
    $region8: #{tpu_custom_call.1} parent=1 // pred_region
      _
    $region9: #{tpu_custom_call.1} parent=1 // pred_fallthru
      _
    // Predicated region
    $region10: #{tpu_custom_call.1} parent=1 // pred_check
      _
    $region11: #{tpu_custom_call.1} parent=1 // pred_check_branch
      %34 = sbr.rel (0) target = $region13
    $region12: #{tpu_custom_call.1} parent=1 // pred_region
      _
    $region13: #{tpu_custom_call.1} parent=1 // pred_fallthru
      _
    // Predicated region
    $region14: #{tpu_custom_call.1} parent=1 // pred_check
      _
    $region15: #{tpu_custom_call.1} parent=1 // pred_check_branch
      %36 = sbr.rel (0) target = $region17
    $region16: #{tpu_custom_call.1} parent=1 // pred_region
      _
    $region17: #{tpu_custom_call.1} parent=1 // pred_fallthru
      _
    // Predicated region
    $region18: #{tpu_custom_call.1} parent=1 // pred_check
      _
    $region19: #{tpu_custom_call.1} parent=1 // pred_check_branch
      %38 = sbr.rel (0) target = $region21
    $region20: #{tpu_custom_call.1} parent=1 // pred_region
      _
    $region21: #{tpu_custom_call.1} parent=1 // pred_fallthru
      _
    // Predicated region
    $region22: #{tpu_custom_call.1} parent=1 // pred_check
      _
    $region23: #{tpu_custom_call.1} parent=1 // pred_check_branch
      %40 = sbr.rel (0) target = $region25
    $region24: #{tpu_custom_call.1} parent=1 // pred_region
      _
    $region25: #{tpu_custom_call.1} parent=1 // pred_fallthru
      _
    // Predicated region
    $region26: #{tpu_custom_call.1} parent=1 // pred_check
      _
    $region27: #{tpu_custom_call.1} parent=1 // pred_check_branch
      %42 = sbr.rel (0) target = $region29
    $region28: #{tpu_custom_call.1} parent=1 // pred_region
      _
    $region29: #{tpu_custom_call.1} parent=1 // pred_fallthru
      _
    // Predicated region
    $region30: #{tpu_custom_call.1} parent=1 // pred_check
      _
    $region31: #{tpu_custom_call.1} parent=1 // pred_check_branch
      %44 = sbr.rel (0) target = $region33
    $region32: #{tpu_custom_call.1} parent=1 // pred_region
      _
    $region33: #{tpu_custom_call.1} parent=1 // pred_fallthru
      _
    // Predicated region
    $region34: #{tpu_custom_call.1} parent=1 // pred_check
      _
    $region35: #{tpu_custom_call.1} parent=1 // pred_check_branch
      %46 = sbr.rel (0) target = $region37
    $region36: #{tpu_custom_call.1} parent=1 // pred_region
      _
    $region37: #{tpu_custom_call.1} parent=1 // pred_fallthru
      _
    // Predicated region
    $region38: #{tpu_custom_call.1} parent=1 // pred_check
      _
    $region39: #{tpu_custom_call.1} parent=1 // pred_check_branch
      %48 = sbr.rel (0) target = $region41
    $region40: #{tpu_custom_call.1} parent=1 // pred_region
      _
    $region41: #{tpu_custom_call.1} parent=1 // pred_fallthru
      _
    // Predicated region
    $region42: #{tpu_custom_call.1} parent=1 // pred_check
      _
    $region43: #{tpu_custom_call.1} parent=1 // pred_check_branch
      %50 = sbr.rel (0) target = $region45
    $region44: #{tpu_custom_call.1} parent=1 // pred_region
      _
    $region45: #{tpu_custom_call.1} parent=1 // pred_fallthru
      _
    // Predicated region
    $region46: #{tpu_custom_call.1} parent=1 // pred_check
      _
    $region47: #{tpu_custom_call.1} parent=1 // pred_check_branch
      %52 = sbr.rel (0) target = $region49
    $region48: #{tpu_custom_call.1} parent=1 // pred_region
      _
    $region49: #{tpu_custom_call.1} parent=1 // pred_fallthru
      _
    // Predicated region
    $region50: #{tpu_custom_call.1} parent=1 // pred_check
      _
    $region51: #{tpu_custom_call.1} parent=1 // pred_check_branch
      %54 = sbr.rel (0) target = $region53
    $region52: #{tpu_custom_call.1} parent=1 // pred_region
      _
    $region53: #{tpu_custom_call.1} parent=1 // pred_fallthru
      _
    // Predicated region
    $region54: #{tpu_custom_call.1} parent=1 // pred_check
      _
    $region55: #{tpu_custom_call.1} parent=1 // pred_check_branch
      %56 = sbr.rel (0) target = $region57
    $region56: #{tpu_custom_call.1} parent=1 // pred_region
      _
    $region57: #{tpu_custom_call.1} parent=1 // pred_fallthru
      _
    // Predicated region
    $region58: #{tpu_custom_call.1} parent=1 // pred_check
      _
    $region59: #{tpu_custom_call.1} parent=1 // pred_check_branch
      %58 = sbr.rel (0) target = $region61
    $region60: #{tpu_custom_call.1} parent=1 // pred_region
      _
    $region61: #{tpu_custom_call.1} parent=1 // pred_fallthru
      _
    // Predicated region
    $region62: #{tpu_custom_call.1} parent=1 // pred_check
      _
    $region63: #{tpu_custom_call.1} parent=1 // pred_check_branch
      %60 = sbr.rel (0) target = $region65
    $region64: #{tpu_custom_call.1} parent=1 // pred_region
      _
    $region65: #{tpu_custom_call.1} parent=1 // pred_fallthru
      _
    // Predicated region
    $region66: #{tpu_custom_call.1} parent=1 // pred_check
      _
    $region67: #{tpu_custom_call.1} parent=1 // pred_check_branch
      %62 = sbr.rel (0) target = $region69
    $region68: #{tpu_custom_call.1} parent=1 // pred_region
      _
    $region69: #{tpu_custom_call.1} parent=1 // pred_fallthru
      _
    // Predicated region
    $region70: #{tpu_custom_call.1} parent=1 // pred_check
      _
    $region71: #{tpu_custom_call.1} parent=1 // pred_check_branch
      %64 = sbr.rel (0) target = $region73
    $region72: #{tpu_custom_call.1} parent=1 // pred_region
      _
    $region73: #{tpu_custom_call.1} parent=1 // pred_fallthru
      _
    // Predicated region
    $region74: #{tpu_custom_call.1} parent=1 // pred_check
      _
    $region75: #{tpu_custom_call.1} parent=1 // pred_check_branch
      %66 = sbr.rel (0) target = $region77
    $region76: #{tpu_custom_call.1} parent=1 // pred_region
      _
    $region77: #{tpu_custom_call.1} parent=1 // pred_fallthru
      _
    // Predicated region
    $region78: #{tpu_custom_call.1} parent=1 // pred_check
      _
    $region79: #{tpu_custom_call.1} parent=1 // pred_check_branch
      %68 = sbr.rel (0) target = $region81
    $region80: #{tpu_custom_call.1} parent=1 // pred_region
      _
    $region81: #{tpu_custom_call.1} parent=1 // pred_fallthru
      _
    // Predicated region
    $region82: #{tpu_custom_call.1} parent=1 // pred_check
      _
    $region83: #{tpu_custom_call.1} parent=1 // pred_check_branch
      %70 = sbr.rel (0) target = $region85
    $region84: #{tpu_custom_call.1} parent=1 // pred_region
      _
    $region85: #{tpu_custom_call.1} parent=1 // pred_fallthru
      _
    // Predicated region
    $region86: #{tpu_custom_call.1} parent=1 // pred_check
      _
    $region87: #{tpu_custom_call.1} parent=1 // pred_check_branch
      %72 = sbr.rel (0) target = $region89
    $region88: #{tpu_custom_call.1} parent=1 // pred_region
      _
    $region89: #{tpu_custom_call.1} parent=1 // pred_fallthru
      _
    // Predicated region
    $region90: #{tpu_custom_call.1} parent=1 // pred_check
      _
    $region91: #{tpu_custom_call.1} parent=1 // pred_check_branch
      %74 = sbr.rel (0) target = $region93
    $region92: #{tpu_custom_call.1} parent=1 // pred_region
      _
    $region93: #{tpu_custom_call.1} parent=1 // pred_fallthru
      _
    %v76 = vld [vmem:[%s0] sm:$0xf]
    %v77 = vld [vmem:[%s1] sm:$0xff]
    %v78 = vld [vmem:[%s1 + $0x8] sm:$0xff]
    %v79 = vld [vmem:[%s1 + $0x10] sm:$0xff]
    %v80 = vld [vmem:[%s1 + $0x18] sm:$0xff]
    %vm81 = vcmask 261120
    %v82 = vsel %vm81, %v77, 0.0
    %v83 = vrot.slane %v82, 4
    %v84 = vadd.f32 %v82, %v83
    %v85 = vrot.slane %v84, 2
    %v86 = vadd.f32 %v84, %v85
    %v87 = vrot.slane %v86, 1
    %v88 = vadd.f32 %v86, %v87
    %v89 = vsel %vm81, %v78, 0.0
    %v90 = vrot.slane %v89, 4
    %v91 = vadd.f32 %v89, %v90
    %v92 = vrot.slane %v91, 2
    %v93 = vadd.f32 %v91, %v92
    %v94 = vrot.slane %v93, 1
    %v95 = vadd.f32 %v93, %v94
    %v96 = vsel %vm81, %v79, 0.0
    %v97 = vrot.slane %v96, 4
    %v98 = vadd.f32 %v96, %v97
    %v99 = vrot.slane %v98, 2
    %v100 = vadd.f32 %v98, %v99
    %v101 = vrot.slane %v100, 1
    %v102 = vadd.f32 %v100, %v101
    %v103 = vsel %vm81, %v80, 0.0
    %v104 = vrot.slane %v103, 4
    %v105 = vadd.f32 %v103, %v104
    %v106 = vrot.slane %v105, 2
    %v107 = vadd.f32 %v105, %v106
    %v108 = vrot.slane %v107, 1
    %v109 = vadd.f32 %v107, %v108
    %v110 = vrcp.pop 8.0
    %v111 = vmul.f32 %v88, %v110
    %v112 = vmul.f32 %v95, %v110
    %v113 = vmul.f32 %v102, %v110
    %v114 = vmul.f32 %v109, %v110
    %v115 = vld [vmem:[%s2] sm:$0xf]
    %v116 = vld [vmem:[%s2 + $0x4] sm:$0xf]
    %v117 = vld [vmem:[%s2 + $0x8] sm:$0xf]
    %v118 = vld [vmem:[%s2 + $0xc] sm:$0xf]
    %v119 = vpack.c.bf16 %v76, %v76
    %v120 = vld [vmem:[%s3] sm:$0xf]
    %v121 = vld [vmem:[%s3 + $0x4] sm:$0xf]
    %v122 = vld [vmem:[%s3 + $0x8] sm:$0xf]
    %v123 = vld [vmem:[%s3 + $0xc] sm:$0xf]
    %v124 = vpack.c.bf16 %v111, %v111
    %v125 = vpack.c.bf16 %v112, %v112
    %v126 = vpack.c.bf16 %v113, %v113
    %v127 = vpack.c.bf16 %v114, %v114
    %v132 = vunpack.c.l.b16 %v124
    %v133 = vunpack.c.l.b16 %v125
    %v134 = vunpack.c.l.b16 %v126
    %v135 = vunpack.c.l.b16 %v127
    %vm136 = vcmask 1041409
    %v137 = vsel %vm136, %v133, %v132
    %vm138 = vcmask 1042434
    %v139 = vsel %vm138, %v134, %v137
    %vm140 = vcmask 1043459
    %v141 = vsel %vm140, %v135, %v139
    %v142 = vpack.c.b16 %v141, %v141
    %v147 = vunpack.c.l.b16 %v120
    %v148 = vunpack.c.l.b16 %v121
    %v149 = vunpack.c.l.b16 %v122
    %v150 = vunpack.c.l.b16 %v123
    %v151 = vpack.c.b16 %v148, %v147
    %v152 = vpack.c.b16 %v150, %v149
    %v156 = vsel %vm81, %v142, 0
    %158 = vmatprep.subr.bf16.mxu0 0
    %159 = vmatpush1.bf16.msra.mxu0 0
    %160 = vmatprep.subr.bf16.mxu0 0
    %161 = vmatpush1.bf16.msra.mxu0 0
    %162 = vmatprep.subr.bf16.mxu0 0
    %163 = vmatpush1.bf16.msra.mxu0 0
    %164 = vmatprep.subr.bf16.mxu0 0
    %165 = vmatpush1.bf16.msra.mxu0 0
    %166 = vmatprep.subr.bf16.mxu0 0
    %167 = vmatpush1.bf16.msra.mxu0 0
    %168 = vmatprep.subr.bf16.mxu0 0
    %169 = vmatpush1.bf16.msra.mxu0 0
    %170 = vmatprep.subr.bf16.mxu0 0
    %171 = vmatpush1.bf16.msra.mxu0 %v152
    %172 = vmatprep.subr.bf16.mxu0 0
    %173 = vmatpush1.bf16.msra.mxu0 %v151
    %174 = vmatprep.subr.bf16.mxu0 0
    %175 = vmatpush2.bf16.msra.mxu0 0
    %176 = vmatprep.subr.bf16.mxu0 0
    %177 = vmatpush2.bf16.msra.mxu0 0
    %178 = vmatprep.subr.bf16.mxu0 0
    %179 = vmatpush2.bf16.msra.mxu0 0
    %180 = vmatprep.subr.bf16.mxu0 0
    %181 = vmatpush2.bf16.msra.mxu0 0
    %182 = vmatprep.subr.bf16.mxu0 0
    %183 = vmatpush2.bf16.msra.mxu0 0
    %184 = vmatprep.subr.bf16.mxu0 0
    %185 = vmatpush2.bf16.msra.mxu0 0
    %186 = vmatprep.subr.bf16.mxu0 0
    %187 = vmatpush2.bf16.msra.mxu0 0
    %188 = vmatprep.subr.bf16.mxu0 0
    %189 = vmatpush2.bf16.msra.mxu0 0
    %190 = vmatprep.mubr.bf16.mxu0 0
    %191 = vmatmul.mubr.bf16.gmra.mxu0 %v156
    %v192 = vpop.f32.mrf.mxu0
    %v193 = vadd.f32 0.0, %v192
    %v194 = vpop.f32.mrf.mxu0
    %v195 = vpop.f32.mrf.mxu0
    %v196 = vpop.f32.mrf.mxu0
    %197 = vdwg.mxu0
    %v202 = vunpack.c.l.b16 %v115
    %v203 = vunpack.c.l.b16 %v116
    %v204 = vunpack.c.l.b16 %v117
    %v205 = vunpack.c.l.b16 %v118
    %v206 = vpack.c.b16 %v203, %v202
    %v207 = vpack.c.b16 %v205, %v204
    %v211 = vsel %vm81, %v119, 0
    %213 = vmatprep.subr.bf16.mxu0 0
    %214 = vmatpush1.bf16.msra.mxu0 0
    %215 = vmatprep.subr.bf16.mxu0 0
    %216 = vmatpush1.bf16.msra.mxu0 0
    %217 = vmatprep.subr.bf16.mxu0 0
    %218 = vmatpush1.bf16.msra.mxu0 0
    %219 = vmatprep.subr.bf16.mxu0 0
    %220 = vmatpush1.bf16.msra.mxu0 0
    %221 = vmatprep.subr.bf16.mxu0 0
    %222 = vmatpush1.bf16.msra.mxu0 0
    %223 = vmatprep.subr.bf16.mxu0 0
    %224 = vmatpush1.bf16.msra.mxu0 0
    %225 = vmatprep.subr.bf16.mxu0 0
    %226 = vmatpush1.bf16.msra.mxu0 %v207
    %227 = vmatprep.subr.bf16.mxu0 0
    %228 = vmatpush1.bf16.msra.mxu0 %v206
    %229 = vmatprep.subr.bf16.mxu0 0
    %230 = vmatpush2.bf16.msra.mxu0 0
    %231 = vmatprep.subr.bf16.mxu0 0
    %232 = vmatpush2.bf16.msra.mxu0 0
    %233 = vmatprep.subr.bf16.mxu0 0
    %234 = vmatpush2.bf16.msra.mxu0 0
    %235 = vmatprep.subr.bf16.mxu0 0
    %236 = vmatpush2.bf16.msra.mxu0 0
    %237 = vmatprep.subr.bf16.mxu0 0
    %238 = vmatpush2.bf16.msra.mxu0 0
    %239 = vmatprep.subr.bf16.mxu0 0
    %240 = vmatpush2.bf16.msra.mxu0 0
    %241 = vmatprep.subr.bf16.mxu0 0
    %242 = vmatpush2.bf16.msra.mxu0 0
    %243 = vmatprep.subr.bf16.mxu0 0
    %244 = vmatpush2.bf16.msra.mxu0 0
    %245 = vmatprep.mubr.bf16.mxu0 0
    %246 = vmatmul.mubr.bf16.gmra.mxu0 %v211
    %v247 = vpop.f32.mrf.mxu0
    %v248 = vadd.f32 %v193, %v247
    %v249 = vpop.f32.mrf.mxu0
    %v250 = vpop.f32.mrf.mxu0
    %v251 = vpop.f32.mrf.mxu0
    %252 = vdwg.mxu0
    %v253 = vld [vmem:[%s4] sm:$0x1]
    %v255 = vlaneseq
    %v256 = vshrl.u32 %v255, 7
    %v257 = vsub.s32 0, %v256
    %v258 = vrot.slane %v253, %v257
    %v260 = vadd.f32 %v248, %v258
    %vm261 = vcmask 125952
    %v262 = vsel %vm261, %v260, 0.0
    %v263 = vrot.slane %v262, 4
    %v264 = vadd.f32 %v262, %v263
    %v265 = vrot.slane %v264, 2
    %v266 = vadd.f32 %v264, %v265
    %v267 = vrot.slane %v266, 1
    %v268 = vadd.f32 %v266, %v267
    %v269 = vrcp.pop 4.0
    %v270 = vmul.f32 %v268, %v269
    %v271 = vsub.f32 %v260, %v270
    %v272 = vmul.f32 %v271, %v271
    %v273 = vsel %vm261, %v272, 0.0
    %v274 = vrot.slane %v273, 4
    %v275 = vadd.f32 %v273, %v274
    %v276 = vrot.slane %v275, 2
    %v277 = vadd.f32 %v275, %v276
    %v278 = vrot.slane %v277, 1
    %v279 = vadd.f32 %v277, %v278
    %v280 = vmul.f32 %v279, %v269
    %v281 = vadd.f32 %v280, 1e-05
    %v282 = vrsqrt.pop %v281
    %v283 = vmul.f32 %v271, %v282
    %v284 = vld [vmem:[%s5] sm:$0x1]
    %v286 = vlaneseq
    %v287 = vshrl.u32 %v286, 7
    %v288 = vsub.s32 0, %v287
    %v289 = vrot.slane %v284, %v288
    %v291 = vmul.f32 %v283, %v289
    %v292 = vld [vmem:[%s6] sm:$0x1]
    %v294 = vlaneseq
    %v295 = vshrl.u32 %v294, 7
    %v296 = vsub.s32 0, %v295
    %v297 = vrot.slane %v292, %v296
    %v299 = vadd.f32 %v291, %v297
    %v300 = vmax.f32 %v299, 0.0
    %v301 = vld [vmem:[%s7] sm:$0xf]
    %v302 = vld [vmem:[%s7 + $0x4] sm:$0xf]
    %v303 = vpack.c.bf16 %v300, %v300
    %v304 = vld [vmem:[%s8] sm:$0x1]
    %v306 = vlaneseq
    %v307 = vshrl.u32 %v306, 7
    %v308 = vsub.s32 0, %v307
    %v309 = vrot.slane %v304, %v308
    %v313 = vunpack.c.l.b16 %v301
    %v314 = vunpack.c.l.b16 %v302
    %v315 = vpack.c.b16 %v314, %v313
    %vm317 = vcmask 130048
    %v319 = vsel %vm317, %v303, 0
    %321 = vmatprep.subr.bf16.mxu0 0
    %322 = vmatpush1.bf16.msra.mxu0 0
    %323 = vmatprep.subr.bf16.mxu0 0
    %324 = vmatpush1.bf16.msra.mxu0 0
    %325 = vmatprep.subr.bf16.mxu0 0
    %326 = vmatpush1.bf16.msra.mxu0 0
    %327 = vmatprep.subr.bf16.mxu0 0
    %328 = vmatpush1.bf16.msra.mxu0 0
    %329 = vmatprep.subr.bf16.mxu0 0
    %330 = vmatpush1.bf16.msra.mxu0 0
    %331 = vmatprep.subr.bf16.mxu0 0
    %332 = vmatpush1.bf16.msra.mxu0 0
    %333 = vmatprep.subr.bf16.mxu0 0
    %334 = vmatpush1.bf16.msra.mxu0 0
    %335 = vmatprep.subr.bf16.mxu0 0
    %336 = vmatpush1.bf16.msra.mxu0 %v315
    %337 = vmatprep.subr.bf16.mxu0 0
    %338 = vmatpush2.bf16.msra.mxu0 0
    %339 = vmatprep.subr.bf16.mxu0 0
    %340 = vmatpush2.bf16.msra.mxu0 0
    %341 = vmatprep.subr.bf16.mxu0 0
    %342 = vmatpush2.bf16.msra.mxu0 0
    %343 = vmatprep.subr.bf16.mxu0 0
    %344 = vmatpush2.bf16.msra.mxu0 0
    %345 = vmatprep.subr.bf16.mxu0 0
    %346 = vmatpush2.bf16.msra.mxu0 0
    %347 = vmatprep.subr.bf16.mxu0 0
    %348 = vmatpush2.bf16.msra.mxu0 0
    %349 = vmatprep.subr.bf16.mxu0 0
    %350 = vmatpush2.bf16.msra.mxu0 0
    %351 = vmatprep.subr.bf16.mxu0 0
    %352 = vmatpush2.bf16.msra.mxu0 0
    %353 = vmatprep.mubr.bf16.mxu0 0
    %354 = vmatmul.mubr.bf16.gmra.mxu0 %v319
    %v355 = vpop.f32.mrf.mxu0
    %v356 = vadd.f32 %v309, %v355
    %v357 = vpop.f32.mrf.mxu0
    %v358 = vpop.f32.mrf.mxu0
    %v359 = vpop.f32.mrf.mxu0
    %360 = vdwg.mxu0
    %v361 = vxor.u32 %v356, 2147483648
    %v362 = vmul.f32 %v361, 1.442695
    %v363 = vpow.pop %v362
    %v364 = vadd.f32 %v363, 1.0
    %v365 = vrcp.pop %v364
    %v366 = vmul.f32 1.0, %v365
    %v367 = vmul.f32 %v366, %v76
    %v368 = vpack.c.bf16 %v367, %v367
    %v369 = vpack.c.bf16 %v78, %v77
    %v370 = vpack.c.bf16 %v80, %v79
    %v371 = vld [vmem:[%s9] sm:$0xf]
    %v372 = vld [vmem:[%s9 + $0x4] sm:$0xf]
    %v373 = vld [vmem:[%s9 + $0x8] sm:$0xf]
    %v374 = vld [vmem:[%s9 + $0xc] sm:$0xf]
    %v375 = vld [vmem:[%s12] sm:$0x1]
    %v377 = vlaneseq
    %v378 = vshrl.u32 %v377, 7
    %v379 = vsub.s32 0, %v378
    %v380 = vrot.slane %v375, %v379
    %v386 = vunpack.c.l.b16 %v371
    %v387 = vunpack.c.l.b16 %v372
    %v388 = vunpack.c.l.b16 %v373
    %v389 = vunpack.c.l.b16 %v374
    %v390 = vpack.c.b16 %v387, %v386
    %v391 = vpack.c.b16 %v389, %v388
    %v395 = vsel %vm81, %v368, 0
    %397 = vmatprep.subr.bf16.mxu0 0
    %398 = vmatpush1.bf16.msra.mxu0 0
    %399 = vmatprep.subr.bf16.mxu0 0
    %400 = vmatpush1.bf16.msra.mxu0 0
    %401 = vmatprep.subr.bf16.mxu0 0
    %402 = vmatpush1.bf16.msra.mxu0 0
    %403 = vmatprep.subr.bf16.mxu0 0
    %404 = vmatpush1.bf16.msra.mxu0 0
    %405 = vmatprep.subr.bf16.mxu0 0
    %406 = vmatpush1.bf16.msra.mxu0 0
    %407 = vmatprep.subr.bf16.mxu0 0
    %408 = vmatpush1.bf16.msra.mxu0 0
    %409 = vmatprep.subr.bf16.mxu0 0
    %410 = vmatpush1.bf16.msra.mxu0 %v391
    %411 = vmatprep.subr.bf16.mxu0 0
    %412 = vmatpush1.bf16.msra.mxu0 %v390
    %413 = vmatprep.subr.bf16.mxu0 0
    %414 = vmatpush2.bf16.msra.mxu0 0
    %415 = vmatprep.subr.bf16.mxu0 0
    %416 = vmatpush2.bf16.msra.mxu0 0
    %417 = vmatprep.subr.bf16.mxu0 0
    %418 = vmatpush2.bf16.msra.mxu0 0
    %419 = vmatprep.subr.bf16.mxu0 0
    %420 = vmatpush2.bf16.msra.mxu0 0
    %421 = vmatprep.subr.bf16.mxu0 0
    %422 = vmatpush2.bf16.msra.mxu0 0
    %423 = vmatprep.subr.bf16.mxu0 0
    %424 = vmatpush2.bf16.msra.mxu0 0
    %425 = vmatprep.subr.bf16.mxu0 0
    %426 = vmatpush2.bf16.msra.mxu0 0
    %427 = vmatprep.subr.bf16.mxu0 0
    %428 = vmatpush2.bf16.msra.mxu0 0
    %429 = vmatprep.mubr.bf16.mxu0 0
    %430 = vmatmul.mubr.bf16.gmra.mxu0 %v395
    %v431 = vpop.f32.mrf.mxu0
    %v432 = vadd.f32 %v380, %v431
    %v433 = vpop.f32.mrf.mxu0
    %v434 = vpop.f32.mrf.mxu0
    %v435 = vpop.f32.mrf.mxu0
    %436 = vdwg.mxu0
    %v439 = vunpack.c.l.s4 1966171168
    %v440 = vunpack.c.0.s8 %v439
    %v441 = vlaneseq
    %v442 = vshrl.u32 %v441, 7
    %v443 = vsub.s32 %v440, %v442
    %v444 = vrot.slane %v432, %v443
    %v445 = vcombine.high %v444, %v444
    %v447 = vunpack.c.l.s4 1966171168
    %v448 = vunpack.c.0.s8 %v447
    %v449 = vlaneseq
    %v450 = vshrl.u32 %v449, 7
    %v451 = vsub.s32 %v448, %v450
    %v452 = vrot.slane %v444, %v451
    %v454 = vunpack.c.l.s4 1966171168
    %v455 = vunpack.c.0.s8 %v454
    %v456 = vlaneseq
    %v457 = vshrl.u32 %v456, 7
    %v458 = vsub.s32 %v455, %v457
    %v459 = vrot.slane %v445, %v458
    %v460 = vcombine.high %v452, %v452
    %v461 = vcombine.high %v459, %v459
    %v466 = vld [vmem:[%s10] sm:$0xf]
    %v467 = vld [vmem:[%s10 + $0x4] sm:$0xf]
    %v468 = vld [vmem:[%s10 + $0x8] sm:$0xf]
    %v469 = vld [vmem:[%s10 + $0xc] sm:$0xf]
    %v470 = vld [vmem:[%s13] sm:$0x1]
    %v472 = vlaneseq
    %v473 = vshrl.u32 %v472, 7
    %v474 = vsub.s32 0, %v473
    %v475 = vrot.slane %v470, %v474
    %v481 = vunpack.c.l.b16 %v466
    %v482 = vunpack.c.l.b16 %v467
    %v483 = vunpack.c.l.b16 %v468
    %v484 = vunpack.c.l.b16 %v469
    %v485 = vpack.c.b16 %v482, %v481
    %v486 = vpack.c.b16 %v484, %v483
    %v490 = vsel %vm81, %v369, 0
    %v493 = vsel %vm81, %v370, 0
    %495 = vmatprep.subr.bf16.mxu0 0
    %496 = vmatpush1.bf16.msra.mxu0 0
    %497 = vmatprep.subr.bf16.mxu0 0
    %498 = vmatpush1.bf16.msra.mxu0 0
    %499 = vmatprep.subr.bf16.mxu0 0
    %500 = vmatpush1.bf16.msra.mxu0 0
    %501 = vmatprep.subr.bf16.mxu0 0
    %502 = vmatpush1.bf16.msra.mxu0 0
    %503 = vmatprep.subr.bf16.mxu0 0
    %504 = vmatpush1.bf16.msra.mxu0 0
    %505 = vmatprep.subr.bf16.mxu0 0
    %506 = vmatpush1.bf16.msra.mxu0 0
    %507 = vmatprep.subr.bf16.mxu0 0
    %508 = vmatpush1.bf16.msra.mxu0 %v486
    %509 = vmatprep.subr.bf16.mxu0 0
    %510 = vmatpush1.bf16.msra.mxu0 %v485
    %511 = vmatprep.subr.bf16.mxu0 0
    %512 = vmatpush2.bf16.msra.mxu0 0
    %513 = vmatprep.subr.bf16.mxu0 0
    %514 = vmatpush2.bf16.msra.mxu0 0
    %515 = vmatprep.subr.bf16.mxu0 0
    %516 = vmatpush2.bf16.msra.mxu0 0
    %517 = vmatprep.subr.bf16.mxu0 0
    %518 = vmatpush2.bf16.msra.mxu0 0
    %519 = vmatprep.subr.bf16.mxu0 0
    %520 = vmatpush2.bf16.msra.mxu0 0
    %521 = vmatprep.subr.bf16.mxu0 0
    %522 = vmatpush2.bf16.msra.mxu0 0
    %523 = vmatprep.subr.bf16.mxu0 0
    %524 = vmatpush2.bf16.msra.mxu0 0
    %525 = vmatprep.subr.bf16.mxu0 0
    %526 = vmatpush2.bf16.msra.mxu0 0
    %527 = vmatprep.mubr.bf16.mxu0 0
    %528 = vmatmul.mubr.bf16.gmra.mxu0 %v490
    %v529 = vpop.f32.mrf.mxu0
    %v530 = vadd.f32 %v475, %v529
    %v531 = vpop.f32.mrf.mxu0
    %v532 = vpop.f32.mrf.mxu0
    %v533 = vadd.f32 %v475, %v532
    %v534 = vpop.f32.mrf.mxu0
    %535 = vmatprep.mubr.bf16.mxu0 0
    %536 = vmatmul.mubr.bf16.gmra.mxu0 %v493
    %v537 = vpop.f32.mrf.mxu0
    %v538 = vadd.f32 %v475, %v537
    %v539 = vpop.f32.mrf.mxu0
    %v540 = vpop.f32.mrf.mxu0
    %v541 = vadd.f32 %v475, %v540
    %v542 = vpop.f32.mrf.mxu0
    %543 = vdwg.mxu0
    %v544 = vld [vmem:[%s11] sm:$0xf]
    %v545 = vld [vmem:[%s11 + $0x4] sm:$0xf]
    %v546 = vld [vmem:[%s11 + $0x8] sm:$0xf]
    %v547 = vld [vmem:[%s11 + $0xc] sm:$0xf]
    %v548 = vld [vmem:[%s14] sm:$0x1]
    %v550 = vlaneseq
    %v551 = vshrl.u32 %v550, 7
    %v552 = vsub.s32 0, %v551
    %v553 = vrot.slane %v548, %v552
    %v559 = vunpack.c.l.b16 %v544
    %v560 = vunpack.c.l.b16 %v545
    %v561 = vunpack.c.l.b16 %v546
    %v562 = vunpack.c.l.b16 %v547
    %v563 = vpack.c.b16 %v560, %v559
    %v564 = vpack.c.b16 %v562, %v561
    %567 = vmatprep.subr.bf16.mxu0 0
    %568 = vmatpush1.bf16.msra.mxu0 0
    %569 = vmatprep.subr.bf16.mxu0 0
    %570 = vmatpush1.bf16.msra.mxu0 0
    %571 = vmatprep.subr.bf16.mxu0 0
    %572 = vmatpush1.bf16.msra.mxu0 0
    %573 = vmatprep.subr.bf16.mxu0 0
    %574 = vmatpush1.bf16.msra.mxu0 0
    %575 = vmatprep.subr.bf16.mxu0 0
    %576 = vmatpush1.bf16.msra.mxu0 0
    %577 = vmatprep.subr.bf16.mxu0 0
    %578 = vmatpush1.bf16.msra.mxu0 0
    %579 = vmatprep.subr.bf16.mxu0 0
    %580 = vmatpush1.bf16.msra.mxu0 %v564
    %581 = vmatprep.subr.bf16.mxu0 0
    %582 = vmatpush1.bf16.msra.mxu0 %v563
    %583 = vmatprep.subr.bf16.mxu0 0
    %584 = vmatpush2.bf16.msra.mxu0 0
    %585 = vmatprep.subr.bf16.mxu0 0
    %586 = vmatpush2.bf16.msra.mxu0 0
    %587 = vmatprep.subr.bf16.mxu0 0
    %588 = vmatpush2.bf16.msra.mxu0 0
    %589 = vmatprep.subr.bf16.mxu0 0
    %590 = vmatpush2.bf16.msra.mxu0 0
    %591 = vmatprep.subr.bf16.mxu0 0
    %592 = vmatpush2.bf16.msra.mxu0 0
    %593 = vmatprep.subr.bf16.mxu0 0
    %594 = vmatpush2.bf16.msra.mxu0 0
    %595 = vmatprep.subr.bf16.mxu0 0
    %596 = vmatpush2.bf16.msra.mxu0 0
    %597 = vmatprep.subr.bf16.mxu0 0
    %598 = vmatpush2.bf16.msra.mxu0 0
    %599 = vmatprep.mubr.bf16.mxu0 0
    %600 = vmatmul.mubr.bf16.gmra.mxu0 %v490
    %v601 = vpop.f32.mrf.mxu0
    %v602 = vadd.f32 %v553, %v601
    %v603 = vpop.f32.mrf.mxu0
    %v604 = vpop.f32.mrf.mxu0
    %v605 = vadd.f32 %v553, %v604
    %v606 = vpop.f32.mrf.mxu0
    %607 = vmatprep.mubr.bf16.mxu0 0
    %608 = vmatmul.mubr.bf16.gmra.mxu0 %v493
    %v609 = vpop.f32.mrf.mxu0
    %v610 = vadd.f32 %v553, %v609
    %v611 = vpop.f32.mrf.mxu0
    %v612 = vpop.f32.mrf.mxu0
    %v613 = vadd.f32 %v553, %v612
    %v614 = vpop.f32.mrf.mxu0
    %615 = vdwg.mxu0
    %v616 = vpack.c.bf16 %v452, %v452
    %v617 = vpack.c.bf16 %v459, %v459
    %v618 = vpack.c.bf16 %v460, %v460
    %v619 = vpack.c.bf16 %v461, %v461
    %v620 = vpack.c.bf16 %v530, %v530
    %v621 = vpack.c.bf16 %v533, %v533
    %v622 = vpack.c.bf16 %v538, %v538
    %v623 = vpack.c.bf16 %v541, %v541
    %v625 = vsel %vm317, %v616, 0
    %v628 = vsel %vm317, %v620, 0
    %630 = vmatprep.subr.bf16.mxu0 0
    %631 = vmatpush1.bf16.xpose.msra.mxu0 0
    %632 = vmatprep.subr.bf16.mxu0 0
    %633 = vmatpush1.bf16.xpose.msra.mxu0 0
    %634 = vmatprep.subr.bf16.mxu0 0
    %635 = vmatpush1.bf16.xpose.msra.mxu0 0
    %636 = vmatprep.subr.bf16.mxu0 0
    %637 = vmatpush1.bf16.xpose.msra.mxu0 0
    %638 = vmatprep.subr.bf16.mxu0 0
    %639 = vmatpush1.bf16.xpose.msra.mxu0 0
    %640 = vmatprep.subr.bf16.mxu0 0
    %641 = vmatpush1.bf16.xpose.msra.mxu0 0
    %642 = vmatprep.subr.bf16.mxu0 0
    %643 = vmatpush1.bf16.xpose.msra.mxu0 0
    %644 = vmatprep.subr.bf16.mxu0 0
    %645 = vmatpush1.bf16.xpose.msra.mxu0 %v628
    %646 = vmatprep.subr.bf16.mxu0 0
    %647 = vmatpush2.bf16.xpose.msra.mxu0 0
    %648 = vmatprep.subr.bf16.mxu0 0
    %649 = vmatpush2.bf16.xpose.msra.mxu0 0
    %650 = vmatprep.subr.bf16.mxu0 0
    %651 = vmatpush2.bf16.xpose.msra.mxu0 0
    %652 = vmatprep.subr.bf16.mxu0 0
    %653 = vmatpush2.bf16.xpose.msra.mxu0 0
    %654 = vmatprep.subr.bf16.mxu0 0
    %655 = vmatpush2.bf16.xpose.msra.mxu0 0
    %656 = vmatprep.subr.bf16.mxu0 0
    %657 = vmatpush2.bf16.xpose.msra.mxu0 0
    %658 = vmatprep.subr.bf16.mxu0 0
    %659 = vmatpush2.bf16.xpose.msra.mxu0 0
    %660 = vmatprep.subr.bf16.mxu0 0
    %661 = vmatpush2.bf16.xpose.msra.mxu0 0
    %662 = vmatprep.mubr.bf16.mxu0 0
    %663 = vmatmul.mubr.bf16.gmra.mxu0 %v625
    %v664 = vpop.f32.mrf.mxu0
    %v665 = vadd.f32 0.0, %v664
    %v666 = vpop.f32.mrf.mxu0
    %v667 = vpop.f32.mrf.mxu0
    %v668 = vpop.f32.mrf.mxu0
    %669 = vdwg.mxu0
    %v671 = vsel %vm317, %v617, 0
    %v674 = vsel %vm317, %v621, 0
    %676 = vmatprep.subr.bf16.mxu0 0
    %677 = vmatpush1.bf16.xpose.msra.mxu0 0
    %678 = vmatprep.subr.bf16.mxu0 0
    %679 = vmatpush1.bf16.xpose.msra.mxu0 0
    %680 = vmatprep.subr.bf16.mxu0 0
    %681 = vmatpush1.bf16.xpose.msra.mxu0 0
    %682 = vmatprep.subr.bf16.mxu0 0
    %683 = vmatpush1.bf16.xpose.msra.mxu0 0
    %684 = vmatprep.subr.bf16.mxu0 0
    %685 = vmatpush1.bf16.xpose.msra.mxu0 0
    %686 = vmatprep.subr.bf16.mxu0 0
    %687 = vmatpush1.bf16.xpose.msra.mxu0 0
    %688 = vmatprep.subr.bf16.mxu0 0
    %689 = vmatpush1.bf16.xpose.msra.mxu0 0
    %690 = vmatprep.subr.bf16.mxu0 0
    %691 = vmatpush1.bf16.xpose.msra.mxu0 %v674
    %692 = vmatprep.subr.bf16.mxu0 0
    %693 = vmatpush2.bf16.xpose.msra.mxu0 0
    %694 = vmatprep.subr.bf16.mxu0 0
    %695 = vmatpush2.bf16.xpose.msra.mxu0 0
    %696 = vmatprep.subr.bf16.mxu0 0
    %697 = vmatpush2.bf16.xpose.msra.mxu0 0
    %698 = vmatprep.subr.bf16.mxu0 0
    %699 = vmatpush2.bf16.xpose.msra.mxu0 0
    %700 = vmatprep.subr.bf16.mxu0 0
    %701 = vmatpush2.bf16.xpose.msra.mxu0 0
    %702 = vmatprep.subr.bf16.mxu0 0
    %703 = vmatpush2.bf16.xpose.msra.mxu0 0
    %704 = vmatprep.subr.bf16.mxu0 0
    %705 = vmatpush2.bf16.xpose.msra.mxu0 0
    %706 = vmatprep.subr.bf16.mxu0 0
    %707 = vmatpush2.bf16.xpose.msra.mxu0 0
    %708 = vmatprep.mubr.bf16.mxu0 0
    %709 = vmatmul.mubr.bf16.gmra.mxu0 %v671
    %v710 = vpop.f32.mrf.mxu0
    %v711 = vadd.f32 0.0, %v710
    %v712 = vpop.f32.mrf.mxu0
    %v713 = vpop.f32.mrf.mxu0
    %v714 = vpop.f32.mrf.mxu0
    %715 = vdwg.mxu0
    %v717 = vsel %vm317, %v618, 0
    %v720 = vsel %vm317, %v622, 0
    %722 = vmatprep.subr.bf16.mxu0 0
    %723 = vmatpush1.bf16.xpose.msra.mxu0 0
    %724 = vmatprep.subr.bf16.mxu0 0
    %725 = vmatpush1.bf16.xpose.msra.mxu0 0
    %726 = vmatprep.subr.bf16.mxu0 0
    %727 = vmatpush1.bf16.xpose.msra.mxu0 0
    %728 = vmatprep.subr.bf16.mxu0 0
    %729 = vmatpush1.bf16.xpose.msra.mxu0 0
    %730 = vmatprep.subr.bf16.mxu0 0
    %731 = vmatpush1.bf16.xpose.msra.mxu0 0
    %732 = vmatprep.subr.bf16.mxu0 0
    %733 = vmatpush1.bf16.xpose.msra.mxu0 0
    %734 = vmatprep.subr.bf16.mxu0 0
    %735 = vmatpush1.bf16.xpose.msra.mxu0 0
    %736 = vmatprep.subr.bf16.mxu0 0
    %737 = vmatpush1.bf16.xpose.msra.mxu0 %v720
    %738 = vmatprep.subr.bf16.mxu0 0
    %739 = vmatpush2.bf16.xpose.msra.mxu0 0
    %740 = vmatprep.subr.bf16.mxu0 0
    %741 = vmatpush2.bf16.xpose.msra.mxu0 0
    %742 = vmatprep.subr.bf16.mxu0 0
    %743 = vmatpush2.bf16.xpose.msra.mxu0 0
    %744 = vmatprep.subr.bf16.mxu0 0
    %745 = vmatpush2.bf16.xpose.msra.mxu0 0
    %746 = vmatprep.subr.bf16.mxu0 0
    %747 = vmatpush2.bf16.xpose.msra.mxu0 0
    %748 = vmatprep.subr.bf16.mxu0 0
    %749 = vmatpush2.bf16.xpose.msra.mxu0 0
    %750 = vmatprep.subr.bf16.mxu0 0
    %751 = vmatpush2.bf16.xpose.msra.mxu0 0
    %752 = vmatprep.subr.bf16.mxu0 0
    %753 = vmatpush2.bf16.xpose.msra.mxu0 0
    %754 = vmatprep.mubr.bf16.mxu0 0
    %755 = vmatmul.mubr.bf16.gmra.mxu0 %v717
    %v756 = vpop.f32.mrf.mxu0
    %v757 = vadd.f32 0.0, %v756
    %v758 = vpop.f32.mrf.mxu0
    %v759 = vpop.f32.mrf.mxu0
    %v760 = vpop.f32.mrf.mxu0
    %761 = vdwg.mxu0
    %v763 = vsel %vm317, %v619, 0
    %v766 = vsel %vm317, %v623, 0
    %768 = vmatprep.subr.bf16.mxu0 0
    %769 = vmatpush1.bf16.xpose.msra.mxu0 0
    %770 = vmatprep.subr.bf16.mxu0 0
    %771 = vmatpush1.bf16.xpose.msra.mxu0 0
    %772 = vmatprep.subr.bf16.mxu0 0
    %773 = vmatpush1.bf16.xpose.msra.mxu0 0
    %774 = vmatprep.subr.bf16.mxu0 0
    %775 = vmatpush1.bf16.xpose.msra.mxu0 0
    %776 = vmatprep.subr.bf16.mxu0 0
    %777 = vmatpush1.bf16.xpose.msra.mxu0 0
    %778 = vmatprep.subr.bf16.mxu0 0
    %779 = vmatpush1.bf16.xpose.msra.mxu0 0
    %780 = vmatprep.subr.bf16.mxu0 0
    %781 = vmatpush1.bf16.xpose.msra.mxu0 0
    %782 = vmatprep.subr.bf16.mxu0 0
    %783 = vmatpush1.bf16.xpose.msra.mxu0 %v766
    %784 = vmatprep.subr.bf16.mxu0 0
    %785 = vmatpush2.bf16.xpose.msra.mxu0 0
    %786 = vmatprep.subr.bf16.mxu0 0
    %787 = vmatpush2.bf16.xpose.msra.mxu0 0
    %788 = vmatprep.subr.bf16.mxu0 0
    %789 = vmatpush2.bf16.xpose.msra.mxu0 0
    %790 = vmatprep.subr.bf16.mxu0 0
    %791 = vmatpush2.bf16.xpose.msra.mxu0 0
    %792 = vmatprep.subr.bf16.mxu0 0
    %793 = vmatpush2.bf16.xpose.msra.mxu0 0
    %794 = vmatprep.subr.bf16.mxu0 0
    %795 = vmatpush2.bf16.xpose.msra.mxu0 0
    %796 = vmatprep.subr.bf16.mxu0 0
    %797 = vmatpush2.bf16.xpose.msra.mxu0 0
    %798 = vmatprep.subr.bf16.mxu0 0
    %799 = vmatpush2.bf16.xpose.msra.mxu0 0
    %800 = vmatprep.mubr.bf16.mxu0 0
    %801 = vmatmul.mubr.bf16.gmra.mxu0 %v763
    %v802 = vpop.f32.mrf.mxu0
    %v803 = vadd.f32 0.0, %v802
    %v804 = vpop.f32.mrf.mxu0
    %v805 = vpop.f32.mrf.mxu0
    %v806 = vpop.f32.mrf.mxu0
    %807 = vdwg.mxu0
    %v808 = vmul.f32 %v665, 0.25
    %v809 = vmul.f32 %v711, 0.25
    %v810 = vmul.f32 %v757, 0.25
    %v811 = vmul.f32 %v803, 0.25
    %vm812 = vcmask 57344
    %v813 = vsel %vm812, %v808, -inf
    %814 = vmax.xlane.f32.xlu0 %v813
    %v815 = vpop.xlane.xlu0 %814
    %v816 = vsel %vm812, %v809, -inf
    %817 = vmax.xlane.f32.xlu0 %v816
    %v818 = vpop.xlane.xlu0 %817
    %v819 = vsel %vm812, %v810, -inf
    %820 = vmax.xlane.f32.xlu0 %v819
    %v821 = vpop.xlane.xlu0 %820
    %v822 = vsel %vm812, %v811, -inf
    %823 = vmax.xlane.f32.xlu0 %v822
    %v824 = vpop.xlane.xlu0 %823
    %v825 = vsub.f32 %v808, %v815
    %v826 = vsub.f32 %v809, %v818
    %v827 = vsub.f32 %v810, %v821
    %v828 = vsub.f32 %v811, %v824
    %v829 = vmul.f32 %v825, 1.442695
    %v830 = vpow.pop %v829
    %v831 = vmul.f32 %v826, 1.442695
    %v832 = vpow.pop %v831
    %v833 = vmul.f32 %v827, 1.442695
    %v834 = vpow.pop %v833
    %v835 = vmul.f32 %v828, 1.442695
    %v836 = vpow.pop %v835
    %v837 = vsel %vm812, %v830, 0.0
    %838 = vadd.xlane.f32.xlu0 %v837
    %v839 = vpop.xlane.xlu0 %838
    %v840 = vsel %vm812, %v832, 0.0
    %841 = vadd.xlane.f32.xlu0 %v840
    %v842 = vpop.xlane.xlu0 %841
    %v843 = vsel %vm812, %v834, 0.0
    %844 = vadd.xlane.f32.xlu0 %v843
    %v845 = vpop.xlane.xlu0 %844
    %v846 = vsel %vm812, %v836, 0.0
    %847 = vadd.xlane.f32.xlu0 %v846
    %v848 = vpop.xlane.xlu0 %847
    %v849 = vrcp.pop %v839
    %v850 = vrcp.pop %v842
    %v851 = vrcp.pop %v845
    %v852 = vrcp.pop %v848
    %v853 = vmul.f32 %v830, %v849
    %v854 = vmul.f32 %v832, %v850
    %v855 = vmul.f32 %v834, %v851
    %v856 = vmul.f32 %v836, %v852
    %v857 = vadd.f32 %v853, 0.0
    %v858 = vadd.f32 %v854, 0.0
    %v859 = vadd.f32 %v855, 0.0
    %v860 = vadd.f32 %v856, 0.0
    %v861 = vpack.c.bf16 %v853, %v853
    %v862 = vpack.c.bf16 %v854, %v854
    %v863 = vpack.c.bf16 %v855, %v855
    %v864 = vpack.c.bf16 %v856, %v856
    %v865 = vpack.c.bf16 %v602, %v602
    %v866 = vpack.c.bf16 %v605, %v605
    %v867 = vpack.c.bf16 %v610, %v610
    %v868 = vpack.c.bf16 %v613, %v613
    %vm869 = vcmask 64512
    %v871 = vsel %vm869, %v861, 0
    %vm873 = vcmask 1043456
    %v875 = vsel %vm873, %v865, 0
    %877 = vmatprep.subr.bf16.mxu0 0
    %878 = vmatpush1.bf16.msra.mxu0 0
    %879 = vmatprep.subr.bf16.mxu0 0
    %880 = vmatpush1.bf16.msra.mxu0 0
    %881 = vmatprep.subr.bf16.mxu0 0
    %882 = vmatpush1.bf16.msra.mxu0 0
    %883 = vmatprep.subr.bf16.mxu0 0
    %884 = vmatpush1.bf16.msra.mxu0 0
    %885 = vmatprep.subr.bf16.mxu0 0
    %886 = vmatpush1.bf16.msra.mxu0 0
    %887 = vmatprep.subr.bf16.mxu0 0
    %888 = vmatpush1.bf16.msra.mxu0 0
    %889 = vmatprep.subr.bf16.mxu0 0
    %890 = vmatpush1.bf16.msra.mxu0 0
    %891 = vmatprep.subr.bf16.mxu0 0
    %892 = vmatpush1.bf16.msra.mxu0 %v875
    %893 = vmatprep.subr.bf16.mxu0 0
    %894 = vmatpush2.bf16.msra.mxu0 0
    %895 = vmatprep.subr.bf16.mxu0 0
    %896 = vmatpush2.bf16.msra.mxu0 0
    %897 = vmatprep.subr.bf16.mxu0 0
    %898 = vmatpush2.bf16.msra.mxu0 0
    %899 = vmatprep.subr.bf16.mxu0 0
    %900 = vmatpush2.bf16.msra.mxu0 0
    %901 = vmatprep.subr.bf16.mxu0 0
    %902 = vmatpush2.bf16.msra.mxu0 0
    %903 = vmatprep.subr.bf16.mxu0 0
    %904 = vmatpush2.bf16.msra.mxu0 0
    %905 = vmatprep.subr.bf16.mxu0 0
    %906 = vmatpush2.bf16.msra.mxu0 0
    %907 = vmatprep.subr.bf16.mxu0 0
    %908 = vmatpush2.bf16.msra.mxu0 0
    %909 = vmatprep.mubr.bf16.mxu0 0
    %910 = vmatmul.mubr.bf16.gmra.mxu0 %v871
    %v911 = vpop.f32.mrf.mxu0
    %v912 = vadd.f32 0.0, %v911
    %v913 = vpop.f32.mrf.mxu0
    %v914 = vpop.f32.mrf.mxu0
    %v915 = vpop.f32.mrf.mxu0
    %916 = vdwg.mxu0
    %v918 = vsel %vm869, %v862, 0
    %v921 = vsel %vm873, %v866, 0
    %923 = vmatprep.subr.bf16.mxu0 0
    %924 = vmatpush1.bf16.msra.mxu0 0
    %925 = vmatprep.subr.bf16.mxu0 0
    %926 = vmatpush1.bf16.msra.mxu0 0
    %927 = vmatprep.subr.bf16.mxu0 0
    %928 = vmatpush1.bf16.msra.mxu0 0
    %929 = vmatprep.subr.bf16.mxu0 0
    %930 = vmatpush1.bf16.msra.mxu0 0
    %931 = vmatprep.subr.bf16.mxu0 0
    %932 = vmatpush1.bf16.msra.mxu0 0
    %933 = vmatprep.subr.bf16.mxu0 0
    %934 = vmatpush1.bf16.msra.mxu0 0
    %935 = vmatprep.subr.bf16.mxu0 0
    %936 = vmatpush1.bf16.msra.mxu0 0
    %937 = vmatprep.subr.bf16.mxu0 0
    %938 = vmatpush1.bf16.msra.mxu0 %v921
    %939 = vmatprep.subr.bf16.mxu0 0
    %940 = vmatpush2.bf16.msra.mxu0 0
    %941 = vmatprep.subr.bf16.mxu0 0
    %942 = vmatpush2.bf16.msra.mxu0 0
    %943 = vmatprep.subr.bf16.mxu0 0
    %944 = vmatpush2.bf16.msra.mxu0 0
    %945 = vmatprep.subr.bf16.mxu0 0
    %946 = vmatpush2.bf16.msra.mxu0 0
    %947 = vmatprep.subr.bf16.mxu0 0
    %948 = vmatpush2.bf16.msra.mxu0 0
    %949 = vmatprep.subr.bf16.mxu0 0
    %950 = vmatpush2.bf16.msra.mxu0 0
    %951 = vmatprep.subr.bf16.mxu0 0
    %952 = vmatpush2.bf16.msra.mxu0 0
    %953 = vmatprep.subr.bf16.mxu0 0
    %954 = vmatpush2.bf16.msra.mxu0 0
    %955 = vmatprep.mubr.bf16.mxu0 0
    %956 = vmatmul.mubr.bf16.gmra.mxu0 %v918
    %v957 = vpop.f32.mrf.mxu0
    %v958 = vadd.f32 0.0, %v957
    %v959 = vpop.f32.mrf.mxu0
    %v960 = vpop.f32.mrf.mxu0
    %v961 = vpop.f32.mrf.mxu0
    %962 = vdwg.mxu0
    %v964 = vsel %vm869, %v863, 0
    %v967 = vsel %vm873, %v867, 0
    %969 = vmatprep.subr.bf16.mxu0 0
    %970 = vmatpush1.bf16.msra.mxu0 0
    %971 = vmatprep.subr.bf16.mxu0 0
    %972 = vmatpush1.bf16.msra.mxu0 0
    %973 = vmatprep.subr.bf16.mxu0 0
    %974 = vmatpush1.bf16.msra.mxu0 0
    %975 = vmatprep.subr.bf16.mxu0 0
    %976 = vmatpush1.bf16.msra.mxu0 0
    %977 = vmatprep.subr.bf16.mxu0 0
    %978 = vmatpush1.bf16.msra.mxu0 0
    %979 = vmatprep.subr.bf16.mxu0 0
    %980 = vmatpush1.bf16.msra.mxu0 0
    %981 = vmatprep.subr.bf16.mxu0 0
    %982 = vmatpush1.bf16.msra.mxu0 0
    %983 = vmatprep.subr.bf16.mxu0 0
    %984 = vmatpush1.bf16.msra.mxu0 %v967
    %985 = vmatprep.subr.bf16.mxu0 0
    %986 = vmatpush2.bf16.msra.mxu0 0
    %987 = vmatprep.subr.bf16.mxu0 0
    %988 = vmatpush2.bf16.msra.mxu0 0
    %989 = vmatprep.subr.bf16.mxu0 0
    %990 = vmatpush2.bf16.msra.mxu0 0
    %991 = vmatprep.subr.bf16.mxu0 0
    %992 = vmatpush2.bf16.msra.mxu0 0
    %993 = vmatprep.subr.bf16.mxu0 0
    %994 = vmatpush2.bf16.msra.mxu0 0
    %995 = vmatprep.subr.bf16.mxu0 0
    %996 = vmatpush2.bf16.msra.mxu0 0
    %997 = vmatprep.subr.bf16.mxu0 0
    %998 = vmatpush2.bf16.msra.mxu0 0
    %999 = vmatprep.subr.bf16.mxu0 0
    %1000 = vmatpush2.bf16.msra.mxu0 0
    %1001 = vmatprep.mubr.bf16.mxu0 0
    %1002 = vmatmul.mubr.bf16.gmra.mxu0 %v964
    %v1003 = vpop.f32.mrf.mxu0
    %v1004 = vadd.f32 0.0, %v1003
    %v1005 = vpop.f32.mrf.mxu0
    %v1006 = vpop.f32.mrf.mxu0
    %v1007 = vpop.f32.mrf.mxu0
    %1008 = vdwg.mxu0
    %v1010 = vsel %vm869, %v864, 0
    %v1013 = vsel %vm873, %v868, 0
    %1015 = vmatprep.subr.bf16.mxu0 0
    %1016 = vmatpush1.bf16.msra.mxu0 0
    %1017 = vmatprep.subr.bf16.mxu0 0
    %1018 = vmatpush1.bf16.msra.mxu0 0
    %1019 = vmatprep.subr.bf16.mxu0 0
    %1020 = vmatpush1.bf16.msra.mxu0 0
    %1021 = vmatprep.subr.bf16.mxu0 0
    %1022 = vmatpush1.bf16.msra.mxu0 0
    %1023 = vmatprep.subr.bf16.mxu0 0
    %1024 = vmatpush1.bf16.msra.mxu0 0
    %1025 = vmatprep.subr.bf16.mxu0 0
    %1026 = vmatpush1.bf16.msra.mxu0 0
    %1027 = vmatprep.subr.bf16.mxu0 0
    %1028 = vmatpush1.bf16.msra.mxu0 0
    %1029 = vmatprep.subr.bf16.mxu0 0
    %1030 = vmatpush1.bf16.msra.mxu0 %v1013
    %1031 = vmatprep.subr.bf16.mxu0 0
    %1032 = vmatpush2.bf16.msra.mxu0 0
    %1033 = vmatprep.subr.bf16.mxu0 0
    %1034 = vmatpush2.bf16.msra.mxu0 0
    %1035 = vmatprep.subr.bf16.mxu0 0
    %1036 = vmatpush2.bf16.msra.mxu0 0
    %1037 = vmatprep.subr.bf16.mxu0 0
    %1038 = vmatpush2.bf16.msra.mxu0 0
    %1039 = vmatprep.subr.bf16.mxu0 0
    %1040 = vmatpush2.bf16.msra.mxu0 0
    %1041 = vmatprep.subr.bf16.mxu0 0
    %1042 = vmatpush2.bf16.msra.mxu0 0
    %1043 = vmatprep.subr.bf16.mxu0 0
    %1044 = vmatpush2.bf16.msra.mxu0 0
    %1045 = vmatprep.subr.bf16.mxu0 0
    %1046 = vmatpush2.bf16.msra.mxu0 0
    %1047 = vmatprep.mubr.bf16.mxu0 0
    %1048 = vmatmul.mubr.bf16.gmra.mxu0 %v1010
    %v1049 = vpop.f32.mrf.mxu0
    %v1050 = vadd.f32 0.0, %v1049
    %v1051 = vpop.f32.mrf.mxu0
    %v1052 = vpop.f32.mrf.mxu0
    %v1053 = vpop.f32.mrf.mxu0
    %1054 = vdwg.mxu0
    %v1055 = vld [vmem:[%s15] sm:$0xf]
    %v1056 = vld [vmem:[%s15 + $0x4] sm:$0xf]
    %v1057 = vpack.c.bf16 %v912, %v912
    %v1058 = vpack.c.bf16 %v958, %v958
    %v1059 = vpack.c.bf16 %v1004, %v1004
    %v1060 = vpack.c.bf16 %v1050, %v1050
    %s1061 = scalar_lea.vmem %s9, 16
    %v1062 = vld [vmem:[%s1061] sm:$0xf]
    %v1063 = vld [vmem:[%s1061 + $0x4] sm:$0xf]
    %v1064 = vld [vmem:[%s1061 + $0x8] sm:$0xf]
    %v1065 = vld [vmem:[%s1061 + $0xc] sm:$0xf]
    %s1066 = scalar_lea.vmem %s12, 1
    %v1067 = vld [vmem:[%s1066] sm:$0x1]
    %v1069 = vlaneseq
    %v1070 = vshrl.u32 %v1069, 7
    %v1071 = vsub.s32 0, %v1070
    %v1072 = vrot.slane %v1067, %v1071
    %v1078 = vunpack.c.l.b16 %v1062
    %v1079 = vunpack.c.l.b16 %v1063
    %v1080 = vunpack.c.l.b16 %v1064
    %v1081 = vunpack.c.l.b16 %v1065
    %v1082 = vpack.c.b16 %v1079, %v1078
    %v1083 = vpack.c.b16 %v1081, %v1080
    %1086 = vmatprep.subr.bf16.mxu0 0
    %1087 = vmatpush1.bf16.msra.mxu0 0
    %1088 = vmatprep.subr.bf16.mxu0 0
    %1089 = vmatpush1.bf16.msra.mxu0 0
    %1090 = vmatprep.subr.bf16.mxu0 0
    %1091 = vmatpush1.bf16.msra.mxu0 0
    %1092 = vmatprep.subr.bf16.mxu0 0
    %1093 = vmatpush1.bf16.msra.mxu0 0
    %1094 = vmatprep.subr.bf16.mxu0 0
    %1095 = vmatpush1.bf16.msra.mxu0 0
    %1096 = vmatprep.subr.bf16.mxu0 0
    %1097 = vmatpush1.bf16.msra.mxu0 0
    %1098 = vmatprep.subr.bf16.mxu0 0
    %1099 = vmatpush1.bf16.msra.mxu0 %v1083
    %1100 = vmatprep.subr.bf16.mxu0 0
    %1101 = vmatpush1.bf16.msra.mxu0 %v1082
    %1102 = vmatprep.subr.bf16.mxu0 0
    %1103 = vmatpush2.bf16.msra.mxu0 0
    %1104 = vmatprep.subr.bf16.mxu0 0
    %1105 = vmatpush2.bf16.msra.mxu0 0
    %1106 = vmatprep.subr.bf16.mxu0 0
    %1107 = vmatpush2.bf16.msra.mxu0 0
    %1108 = vmatprep.subr.bf16.mxu0 0
    %1109 = vmatpush2.bf16.msra.mxu0 0
    %1110 = vmatprep.subr.bf16.mxu0 0
    %1111 = vmatpush2.bf16.msra.mxu0 0
    %1112 = vmatprep.subr.bf16.mxu0 0
    %1113 = vmatpush2.bf16.msra.mxu0 0
    %1114 = vmatprep.subr.bf16.mxu0 0
    %1115 = vmatpush2.bf16.msra.mxu0 0
    %1116 = vmatprep.subr.bf16.mxu0 0
    %1117 = vmatpush2.bf16.msra.mxu0 0
    %1118 = vmatprep.mubr.bf16.mxu0 0
    %1119 = vmatmul.mubr.bf16.gmra.mxu0 %v395
    %v1120 = vpop.f32.mrf.mxu0
    %v1121 = vadd.f32 %v1072, %v1120
    %v1122 = vpop.f32.mrf.mxu0
    %v1123 = vpop.f32.mrf.mxu0
    %v1124 = vpop.f32.mrf.mxu0
    %1125 = vdwg.mxu0
    %v1128 = vunpack.c.l.s4 1966171168
    %v1129 = vunpack.c.0.s8 %v1128
    %v1130 = vlaneseq
    %v1131 = vshrl.u32 %v1130, 7
    %v1132 = vsub.s32 %v1129, %v1131
    %v1133 = vrot.slane %v1121, %v1132
    %v1134 = vcombine.high %v1133, %v1133
    %v1136 = vunpack.c.l.s4 1966171168
    %v1137 = vunpack.c.0.s8 %v1136
    %v1138 = vlaneseq
    %v1139 = vshrl.u32 %v1138, 7
    %v1140 = vsub.s32 %v1137, %v1139
    %v1141 = vrot.slane %v1133, %v1140
    %v1143 = vunpack.c.l.s4 1966171168
    %v1144 = vunpack.c.0.s8 %v1143
    %v1145 = vlaneseq
    %v1146 = vshrl.u32 %v1145, 7
    %v1147 = vsub.s32 %v1144, %v1146
    %v1148 = vrot.slane %v1134, %v1147
    %v1149 = vcombine.high %v1141, %v1141
    %v1150 = vcombine.high %v1148, %v1148
    %s1155 = scalar_lea.vmem %s10, 16
    %v1156 = vld [vmem:[%s1155] sm:$0xf]
    %v1157 = vld [vmem:[%s1155 + $0x4] sm:$0xf]
    %v1158 = vld [vmem:[%s1155 + $0x8] sm:$0xf]
    %v1159 = vld [vmem:[%s1155 + $0xc] sm:$0xf]
    %s1160 = scalar_lea.vmem %s13, 1
    %v1161 = vld [vmem:[%s1160] sm:$0x1]
    %v1163 = vlaneseq
    %v1164 = vshrl.u32 %v1163, 7
    %v1165 = vsub.s32 0, %v1164
    %v1166 = vrot.slane %v1161, %v1165
    %v1172 = vunpack.c.l.b16 %v1156
    %v1173 = vunpack.c.l.b16 %v1157
    %v1174 = vunpack.c.l.b16 %v1158
    %v1175 = vunpack.c.l.b16 %v1159
    %v1176 = vpack.c.b16 %v1173, %v1172
    %v1177 = vpack.c.b16 %v1175, %v1174
    %1180 = vmatprep.subr.bf16.mxu0 0
    %1181 = vmatpush1.bf16.msra.mxu0 0
    %1182 = vmatprep.subr.bf16.mxu0 0
    %1183 = vmatpush1.bf16.msra.mxu0 0
    %1184 = vmatprep.subr.bf16.mxu0 0
    %1185 = vmatpush1.bf16.msra.mxu0 0
    %1186 = vmatprep.subr.bf16.mxu0 0
    %1187 = vmatpush1.bf16.msra.mxu0 0
    %1188 = vmatprep.subr.bf16.mxu0 0
    %1189 = vmatpush1.bf16.msra.mxu0 0
    %1190 = vmatprep.subr.bf16.mxu0 0
    %1191 = vmatpush1.bf16.msra.mxu0 0
    %1192 = vmatprep.subr.bf16.mxu0 0
    %1193 = vmatpush1.bf16.msra.mxu0 %v1177
    %1194 = vmatprep.subr.bf16.mxu0 0
    %1195 = vmatpush1.bf16.msra.mxu0 %v1176
    %1196 = vmatprep.subr.bf16.mxu0 0
    %1197 = vmatpush2.bf16.msra.mxu0 0
    %1198 = vmatprep.subr.bf16.mxu0 0
    %1199 = vmatpush2.bf16.msra.mxu0 0
    %1200 = vmatprep.subr.bf16.mxu0 0
    %1201 = vmatpush2.bf16.msra.mxu0 0
    %1202 = vmatprep.subr.bf16.mxu0 0
    %1203 = vmatpush2.bf16.msra.mxu0 0
    %1204 = vmatprep.subr.bf16.mxu0 0
    %1205 = vmatpush2.bf16.msra.mxu0 0
    %1206 = vmatprep.subr.bf16.mxu0 0
    %1207 = vmatpush2.bf16.msra.mxu0 0
    %1208 = vmatprep.subr.bf16.mxu0 0
    %1209 = vmatpush2.bf16.msra.mxu0 0
    %1210 = vmatprep.subr.bf16.mxu0 0
    %1211 = vmatpush2.bf16.msra.mxu0 0
    %1212 = vmatprep.mubr.bf16.mxu0 0
    %1213 = vmatmul.mubr.bf16.gmra.mxu0 %v490
    %v1214 = vpop.f32.mrf.mxu0
    %v1215 = vadd.f32 %v1166, %v1214
    %v1216 = vpop.f32.mrf.mxu0
    %v1217 = vpop.f32.mrf.mxu0
    %v1218 = vadd.f32 %v1166, %v1217
    %v1219 = vpop.f32.mrf.mxu0
    %1220 = vmatprep.mubr.bf16.mxu0 0
    %1221 = vmatmul.mubr.bf16.gmra.mxu0 %v493
    %v1222 = vpop.f32.mrf.mxu0
    %v1223 = vadd.f32 %v1166, %v1222
    %v1224 = vpop.f32.mrf.mxu0
    %v1225 = vpop.f32.mrf.mxu0
    %v1226 = vadd.f32 %v1166, %v1225
    %v1227 = vpop.f32.mrf.mxu0
    %1228 = vdwg.mxu0
    %s1229 = scalar_lea.vmem %s11, 16
    %v1230 = vld [vmem:[%s1229] sm:$0xf]
    %v1231 = vld [vmem:[%s1229 + $0x4] sm:$0xf]
    %v1232 = vld [vmem:[%s1229 + $0x8] sm:$0xf]
    %v1233 = vld [vmem:[%s1229 + $0xc] sm:$0xf]
    %s1234 = scalar_lea.vmem %s14, 1
    %v1235 = vld [vmem:[%s1234] sm:$0x1]
    %v1237 = vlaneseq
    %v1238 = vshrl.u32 %v1237, 7
    %v1239 = vsub.s32 0, %v1238
    %v1240 = vrot.slane %v1235, %v1239
    %v1246 = vunpack.c.l.b16 %v1230
    %v1247 = vunpack.c.l.b16 %v1231
    %v1248 = vunpack.c.l.b16 %v1232
    %v1249 = vunpack.c.l.b16 %v1233
    %v1250 = vpack.c.b16 %v1247, %v1246
    %v1251 = vpack.c.b16 %v1249, %v1248
    %1254 = vmatprep.subr.bf16.mxu0 0
    %1255 = vmatpush1.bf16.msra.mxu0 0
    %1256 = vmatprep.subr.bf16.mxu0 0
    %1257 = vmatpush1.bf16.msra.mxu0 0
    %1258 = vmatprep.subr.bf16.mxu0 0
    %1259 = vmatpush1.bf16.msra.mxu0 0
    %1260 = vmatprep.subr.bf16.mxu0 0
    %1261 = vmatpush1.bf16.msra.mxu0 0
    %1262 = vmatprep.subr.bf16.mxu0 0
    %1263 = vmatpush1.bf16.msra.mxu0 0
    %1264 = vmatprep.subr.bf16.mxu0 0
    %1265 = vmatpush1.bf16.msra.mxu0 0
    %1266 = vmatprep.subr.bf16.mxu0 0
    %1267 = vmatpush1.bf16.msra.mxu0 %v1251
    %1268 = vmatprep.subr.bf16.mxu0 0
    %1269 = vmatpush1.bf16.msra.mxu0 %v1250
    %1270 = vmatprep.subr.bf16.mxu0 0
    %1271 = vmatpush2.bf16.msra.mxu0 0
    %1272 = vmatprep.subr.bf16.mxu0 0
    %1273 = vmatpush2.bf16.msra.mxu0 0
    %1274 = vmatprep.subr.bf16.mxu0 0
    %1275 = vmatpush2.bf16.msra.mxu0 0
    %1276 = vmatprep.subr.bf16.mxu0 0
    %1277 = vmatpush2.bf16.msra.mxu0 0
    %1278 = vmatprep.subr.bf16.mxu0 0
    %1279 = vmatpush2.bf16.msra.mxu0 0
    %1280 = vmatprep.subr.bf16.mxu0 0
    %1281 = vmatpush2.bf16.msra.mxu0 0
    %1282 = vmatprep.subr.bf16.mxu0 0
    %1283 = vmatpush2.bf16.msra.mxu0 0
    %1284 = vmatprep.subr.bf16.mxu0 0
    %1285 = vmatpush2.bf16.msra.mxu0 0
    %1286 = vmatprep.mubr.bf16.mxu0 0
    %1287 = vmatmul.mubr.bf16.gmra.mxu0 %v490
    %v1288 = vpop.f32.mrf.mxu0
    %v1289 = vadd.f32 %v1240, %v1288
    %v1290 = vpop.f32.mrf.mxu0
    %v1291 = vpop.f32.mrf.mxu0
    %v1292 = vadd.f32 %v1240, %v1291
    %v1293 = vpop.f32.mrf.mxu0
    %1294 = vmatprep.mubr.bf16.mxu0 0
    %1295 = vmatmul.mubr.bf16.gmra.mxu0 %v493
    %v1296 = vpop.f32.mrf.mxu0
    %v1297 = vadd.f32 %v1240, %v1296
    %v1298 = vpop.f32.mrf.mxu0
    %v1299 = vpop.f32.mrf.mxu0
    %v1300 = vadd.f32 %v1240, %v1299
    %v1301 = vpop.f32.mrf.mxu0
    %1302 = vdwg.mxu0
    %v1303 = vpack.c.bf16 %v1141, %v1141
    %v1304 = vpack.c.bf16 %v1148, %v1148
    %v1305 = vpack.c.bf16 %v1149, %v1149
    %v1306 = vpack.c.bf16 %v1150, %v1150
    %v1307 = vpack.c.bf16 %v1215, %v1215
    %v1308 = vpack.c.bf16 %v1218, %v1218
    %v1309 = vpack.c.bf16 %v1223, %v1223
    %v1310 = vpack.c.bf16 %v1226, %v1226
    %v1312 = vsel %vm317, %v1303, 0
    %v1315 = vsel %vm317, %v1307, 0
    %1317 = vmatprep.subr.bf16.mxu0 0
    %1318 = vmatpush1.bf16.xpose.msra.mxu0 0
    %1319 = vmatprep.subr.bf16.mxu0 0
    %1320 = vmatpush1.bf16.xpose.msra.mxu0 0
    %1321 = vmatprep.subr.bf16.mxu0 0
    %1322 = vmatpush1.bf16.xpose.msra.mxu0 0
    %1323 = vmatprep.subr.bf16.mxu0 0
    %1324 = vmatpush1.bf16.xpose.msra.mxu0 0
    %1325 = vmatprep.subr.bf16.mxu0 0
    %1326 = vmatpush1.bf16.xpose.msra.mxu0 0
    %1327 = vmatprep.subr.bf16.mxu0 0
    %1328 = vmatpush1.bf16.xpose.msra.mxu0 0
    %1329 = vmatprep.subr.bf16.mxu0 0
    %1330 = vmatpush1.bf16.xpose.msra.mxu0 0
    %1331 = vmatprep.subr.bf16.mxu0 0
    %1332 = vmatpush1.bf16.xpose.msra.mxu0 %v1315
    %1333 = vmatprep.subr.bf16.mxu0 0
    %1334 = vmatpush2.bf16.xpose.msra.mxu0 0
    %1335 = vmatprep.subr.bf16.mxu0 0
    %1336 = vmatpush2.bf16.xpose.msra.mxu0 0
    %1337 = vmatprep.subr.bf16.mxu0 0
    %1338 = vmatpush2.bf16.xpose.msra.mxu0 0
    %1339 = vmatprep.subr.bf16.mxu0 0
    %1340 = vmatpush2.bf16.xpose.msra.mxu0 0
    %1341 = vmatprep.subr.bf16.mxu0 0
    %1342 = vmatpush2.bf16.xpose.msra.mxu0 0
    %1343 = vmatprep.subr.bf16.mxu0 0
    %1344 = vmatpush2.bf16.xpose.msra.mxu0 0
    %1345 = vmatprep.subr.bf16.mxu0 0
    %1346 = vmatpush2.bf16.xpose.msra.mxu0 0
    %1347 = vmatprep.subr.bf16.mxu0 0
    %1348 = vmatpush2.bf16.xpose.msra.mxu0 0
    %1349 = vmatprep.mubr.bf16.mxu0 0
    %1350 = vmatmul.mubr.bf16.gmra.mxu0 %v1312
    %v1351 = vpop.f32.mrf.mxu0
    %v1352 = vadd.f32 0.0, %v1351
    %v1353 = vpop.f32.mrf.mxu0
    %v1354 = vpop.f32.mrf.mxu0
    %v1355 = vpop.f32.mrf.mxu0
    %1356 = vdwg.mxu0
    %v1358 = vsel %vm317, %v1304, 0
    %v1361 = vsel %vm317, %v1308, 0
    %1363 = vmatprep.subr.bf16.mxu0 0
    %1364 = vmatpush1.bf16.xpose.msra.mxu0 0
    %1365 = vmatprep.subr.bf16.mxu0 0
    %1366 = vmatpush1.bf16.xpose.msra.mxu0 0
    %1367 = vmatprep.subr.bf16.mxu0 0
    %1368 = vmatpush1.bf16.xpose.msra.mxu0 0
    %1369 = vmatprep.subr.bf16.mxu0 0
    %1370 = vmatpush1.bf16.xpose.msra.mxu0 0
    %1371 = vmatprep.subr.bf16.mxu0 0
    %1372 = vmatpush1.bf16.xpose.msra.mxu0 0
    %1373 = vmatprep.subr.bf16.mxu0 0
    %1374 = vmatpush1.bf16.xpose.msra.mxu0 0
    %1375 = vmatprep.subr.bf16.mxu0 0
    %1376 = vmatpush1.bf16.xpose.msra.mxu0 0
    %1377 = vmatprep.subr.bf16.mxu0 0
    %1378 = vmatpush1.bf16.xpose.msra.mxu0 %v1361
    %1379 = vmatprep.subr.bf16.mxu0 0
    %1380 = vmatpush2.bf16.xpose.msra.mxu0 0
    %1381 = vmatprep.subr.bf16.mxu0 0
    %1382 = vmatpush2.bf16.xpose.msra.mxu0 0
    %1383 = vmatprep.subr.bf16.mxu0 0
    %1384 = vmatpush2.bf16.xpose.msra.mxu0 0
    %1385 = vmatprep.subr.bf16.mxu0 0
    %1386 = vmatpush2.bf16.xpose.msra.mxu0 0
    %1387 = vmatprep.subr.bf16.mxu0 0
    %1388 = vmatpush2.bf16.xpose.msra.mxu0 0
    %1389 = vmatprep.subr.bf16.mxu0 0
    %1390 = vmatpush2.bf16.xpose.msra.mxu0 0
    %1391 = vmatprep.subr.bf16.mxu0 0
    %1392 = vmatpush2.bf16.xpose.msra.mxu0 0
    %1393 = vmatprep.subr.bf16.mxu0 0
    %1394 = vmatpush2.bf16.xpose.msra.mxu0 0
    %1395 = vmatprep.mubr.bf16.mxu0 0
    %1396 = vmatmul.mubr.bf16.gmra.mxu0 %v1358
    %v1397 = vpop.f32.mrf.mxu0
    %v1398 = vadd.f32 0.0, %v1397
    %v1399 = vpop.f32.mrf.mxu0
    %v1400 = vpop.f32.mrf.mxu0
    %v1401 = vpop.f32.mrf.mxu0
    %1402 = vdwg.mxu0
    %v1404 = vsel %vm317, %v1305, 0
    %v1407 = vsel %vm317, %v1309, 0
    %1409 = vmatprep.subr.bf16.mxu0 0
    %1410 = vmatpush1.bf16.xpose.msra.mxu0 0
    %1411 = vmatprep.subr.bf16.mxu0 0
    %1412 = vmatpush1.bf16.xpose.msra.mxu0 0
    %1413 = vmatprep.subr.bf16.mxu0 0
    %1414 = vmatpush1.bf16.xpose.msra.mxu0 0
    %1415 = vmatprep.subr.bf16.mxu0 0
    %1416 = vmatpush1.bf16.xpose.msra.mxu0 0
    %1417 = vmatprep.subr.bf16.mxu0 0
    %1418 = vmatpush1.bf16.xpose.msra.mxu0 0
    %1419 = vmatprep.subr.bf16.mxu0 0
    %1420 = vmatpush1.bf16.xpose.msra.mxu0 0
    %1421 = vmatprep.subr.bf16.mxu0 0
    %1422 = vmatpush1.bf16.xpose.msra.mxu0 0
    %1423 = vmatprep.subr.bf16.mxu0 0
    %1424 = vmatpush1.bf16.xpose.msra.mxu0 %v1407
    %1425 = vmatprep.subr.bf16.mxu0 0
    %1426 = vmatpush2.bf16.xpose.msra.mxu0 0
    %1427 = vmatprep.subr.bf16.mxu0 0
    %1428 = vmatpush2.bf16.xpose.msra.mxu0 0
    %1429 = vmatprep.subr.bf16.mxu0 0
    %1430 = vmatpush2.bf16.xpose.msra.mxu0 0
    %1431 = vmatprep.subr.bf16.mxu0 0
    %1432 = vmatpush2.bf16.xpose.msra.mxu0 0
    %1433 = vmatprep.subr.bf16.mxu0 0
    %1434 = vmatpush2.bf16.xpose.msra.mxu0 0
    %1435 = vmatprep.subr.bf16.mxu0 0
    %1436 = vmatpush2.bf16.xpose.msra.mxu0 0
    %1437 = vmatprep.subr.bf16.mxu0 0
    %1438 = vmatpush2.bf16.xpose.msra.mxu0 0
    %1439 = vmatprep.subr.bf16.mxu0 0
    %1440 = vmatpush2.bf16.xpose.msra.mxu0 0
    %1441 = vmatprep.mubr.bf16.mxu0 0
    %1442 = vmatmul.mubr.bf16.gmra.mxu0 %v1404
    %v1443 = vpop.f32.mrf.mxu0
    %v1444 = vadd.f32 0.0, %v1443
    %v1445 = vpop.f32.mrf.mxu0
    %v1446 = vpop.f32.mrf.mxu0
    %v1447 = vpop.f32.mrf.mxu0
    %1448 = vdwg.mxu0
    %v1450 = vsel %vm317, %v1306, 0
    %v1453 = vsel %vm317, %v1310, 0
    %1455 = vmatprep.subr.bf16.mxu0 0
    %1456 = vmatpush1.bf16.xpose.msra.mxu0 0
    %1457 = vmatprep.subr.bf16.mxu0 0
    %1458 = vmatpush1.bf16.xpose.msra.mxu0 0
    %1459 = vmatprep.subr.bf16.mxu0 0
    %1460 = vmatpush1.bf16.xpose.msra.mxu0 0
    %1461 = vmatprep.subr.bf16.mxu0 0
    %1462 = vmatpush1.bf16.xpose.msra.mxu0 0
    %1463 = vmatprep.subr.bf16.mxu0 0
    %1464 = vmatpush1.bf16.xpose.msra.mxu0 0
    %1465 = vmatprep.subr.bf16.mxu0 0
    %1466 = vmatpush1.bf16.xpose.msra.mxu0 0
    %1467 = vmatprep.subr.bf16.mxu0 0
    %1468 = vmatpush1.bf16.xpose.msra.mxu0 0
    %1469 = vmatprep.subr.bf16.mxu0 0
    %1470 = vmatpush1.bf16.xpose.msra.mxu0 %v1453
    %1471 = vmatprep.subr.bf16.mxu0 0
    %1472 = vmatpush2.bf16.xpose.msra.mxu0 0
    %1473 = vmatprep.subr.bf16.mxu0 0
    %1474 = vmatpush2.bf16.xpose.msra.mxu0 0
    %1475 = vmatprep.subr.bf16.mxu0 0
    %1476 = vmatpush2.bf16.xpose.msra.mxu0 0
    %1477 = vmatprep.subr.bf16.mxu0 0
    %1478 = vmatpush2.bf16.xpose.msra.mxu0 0
    %1479 = vmatprep.subr.bf16.mxu0 0
    %1480 = vmatpush2.bf16.xpose.msra.mxu0 0
    %1481 = vmatprep.subr.bf16.mxu0 0
    %1482 = vmatpush2.bf16.xpose.msra.mxu0 0
    %1483 = vmatprep.subr.bf16.mxu0 0
    %1484 = vmatpush2.bf16.xpose.msra.mxu0 0
    %1485 = vmatprep.subr.bf16.mxu0 0
    %1486 = vmatpush2.bf16.xpose.msra.mxu0 0
    %1487 = vmatprep.mubr.bf16.mxu0 0
    %1488 = vmatmul.mubr.bf16.gmra.mxu0 %v1450
    %v1489 = vpop.f32.mrf.mxu0
    %v1490 = vadd.f32 0.0, %v1489
    %v1491 = vpop.f32.mrf.mxu0
    %v1492 = vpop.f32.mrf.mxu0
    %v1493 = vpop.f32.mrf.mxu0
    %1494 = vdwg.mxu0
    %v1495 = vmul.f32 %v1352, 0.25
    %v1496 = vmul.f32 %v1398, 0.25
    %v1497 = vmul.f32 %v1444, 0.25
    %v1498 = vmul.f32 %v1490, 0.25
    %v1499 = vsel %vm812, %v1495, -inf
    %1500 = vmax.xlane.f32.xlu0 %v1499
    %v1501 = vpop.xlane.xlu0 %1500
    %v1502 = vsel %vm812, %v1496, -inf
    %1503 = vmax.xlane.f32.xlu0 %v1502
    %v1504 = vpop.xlane.xlu0 %1503
    %v1505 = vsel %vm812, %v1497, -inf
    %1506 = vmax.xlane.f32.xlu0 %v1505
    %v1507 = vpop.xlane.xlu0 %1506
    %v1508 = vsel %vm812, %v1498, -inf
    %1509 = vmax.xlane.f32.xlu0 %v1508
    %v1510 = vpop.xlane.xlu0 %1509
    %v1511 = vsub.f32 %v1495, %v1501
    %v1512 = vsub.f32 %v1496, %v1504
    %v1513 = vsub.f32 %v1497, %v1507
    %v1514 = vsub.f32 %v1498, %v1510
    %v1515 = vmul.f32 %v1511, 1.442695
    %v1516 = vpow.pop %v1515
    %v1517 = vmul.f32 %v1512, 1.442695
    %v1518 = vpow.pop %v1517
    %v1519 = vmul.f32 %v1513, 1.442695
    %v1520 = vpow.pop %v1519
    %v1521 = vmul.f32 %v1514, 1.442695
    %v1522 = vpow.pop %v1521
    %v1523 = vsel %vm812, %v1516, 0.0
    %1524 = vadd.xlane.f32.xlu0 %v1523
    %v1525 = vpop.xlane.xlu0 %1524
    %v1526 = vsel %vm812, %v1518, 0.0
    %1527 = vadd.xlane.f32.xlu0 %v1526
    %v1528 = vpop.xlane.xlu0 %1527
    %v1529 = vsel %vm812, %v1520, 0.0
    %1530 = vadd.xlane.f32.xlu0 %v1529
    %v1531 = vpop.xlane.xlu0 %1530
    %v1532 = vsel %vm812, %v1522, 0.0
    %1533 = vadd.xlane.f32.xlu0 %v1532
    %v1534 = vpop.xlane.xlu0 %1533
    %v1535 = vrcp.pop %v1525
    %v1536 = vrcp.pop %v1528
    %v1537 = vrcp.pop %v1531
    %v1538 = vrcp.pop %v1534
    %v1539 = vmul.f32 %v1516, %v1535
    %v1540 = vmul.f32 %v1518, %v1536
    %v1541 = vmul.f32 %v1520, %v1537
    %v1542 = vmul.f32 %v1522, %v1538
    %v1543 = vadd.f32 %v857, %v1539
    %v1544 = vadd.f32 %v858, %v1540
    %v1545 = vadd.f32 %v859, %v1541
    %v1546 = vadd.f32 %v860, %v1542
    %v1547 = vpack.c.bf16 %v1539, %v1539
    %v1548 = vpack.c.bf16 %v1540, %v1540
    %v1549 = vpack.c.bf16 %v1541, %v1541
    %v1550 = vpack.c.bf16 %v1542, %v1542
    %v1551 = vpack.c.bf16 %v1289, %v1289
    %v1552 = vpack.c.bf16 %v1292, %v1292
    %v1553 = vpack.c.bf16 %v1297, %v1297
    %v1554 = vpack.c.bf16 %v1300, %v1300
    %v1556 = vsel %vm869, %v1547, 0
    %v1559 = vsel %vm873, %v1551, 0
    %1561 = vmatprep.subr.bf16.mxu0 0
    %1562 = vmatpush1.bf16.msra.mxu0 0
    %1563 = vmatprep.subr.bf16.mxu0 0
    %1564 = vmatpush1.bf16.msra.mxu0 0
    %1565 = vmatprep.subr.bf16.mxu0 0
    %1566 = vmatpush1.bf16.msra.mxu0 0
    %1567 = vmatprep.subr.bf16.mxu0 0
    %1568 = vmatpush1.bf16.msra.mxu0 0
    %1569 = vmatprep.subr.bf16.mxu0 0
    %1570 = vmatpush1.bf16.msra.mxu0 0
    %1571 = vmatprep.subr.bf16.mxu0 0
    %1572 = vmatpush1.bf16.msra.mxu0 0
    %1573 = vmatprep.subr.bf16.mxu0 0
    %1574 = vmatpush1.bf16.msra.mxu0 0
    %1575 = vmatprep.subr.bf16.mxu0 0
    %1576 = vmatpush1.bf16.msra.mxu0 %v1559
    %1577 = vmatprep.subr.bf16.mxu0 0
    %1578 = vmatpush2.bf16.msra.mxu0 0
    %1579 = vmatprep.subr.bf16.mxu0 0
    %1580 = vmatpush2.bf16.msra.mxu0 0
    %1581 = vmatprep.subr.bf16.mxu0 0
    %1582 = vmatpush2.bf16.msra.mxu0 0
    %1583 = vmatprep.subr.bf16.mxu0 0
    %1584 = vmatpush2.bf16.msra.mxu0 0
    %1585 = vmatprep.subr.bf16.mxu0 0
    %1586 = vmatpush2.bf16.msra.mxu0 0
    %1587 = vmatprep.subr.bf16.mxu0 0
    %1588 = vmatpush2.bf16.msra.mxu0 0
    %1589 = vmatprep.subr.bf16.mxu0 0
    %1590 = vmatpush2.bf16.msra.mxu0 0
    %1591 = vmatprep.subr.bf16.mxu0 0
    %1592 = vmatpush2.bf16.msra.mxu0 0
    %1593 = vmatprep.mubr.bf16.mxu0 0
    %1594 = vmatmul.mubr.bf16.gmra.mxu0 %v1556
    %v1595 = vpop.f32.mrf.mxu0
    %v1596 = vadd.f32 0.0, %v1595
    %v1597 = vpop.f32.mrf.mxu0
    %v1598 = vpop.f32.mrf.mxu0
    %v1599 = vpop.f32.mrf.mxu0
    %1600 = vdwg.mxu0
    %v1602 = vsel %vm869, %v1548, 0
    %v1605 = vsel %vm873, %v1552, 0
    %1607 = vmatprep.subr.bf16.mxu0 0
    %1608 = vmatpush1.bf16.msra.mxu0 0
    %1609 = vmatprep.subr.bf16.mxu0 0
    %1610 = vmatpush1.bf16.msra.mxu0 0
    %1611 = vmatprep.subr.bf16.mxu0 0
    %1612 = vmatpush1.bf16.msra.mxu0 0
    %1613 = vmatprep.subr.bf16.mxu0 0
    %1614 = vmatpush1.bf16.msra.mxu0 0
    %1615 = vmatprep.subr.bf16.mxu0 0
    %1616 = vmatpush1.bf16.msra.mxu0 0
    %1617 = vmatprep.subr.bf16.mxu0 0
    %1618 = vmatpush1.bf16.msra.mxu0 0
    %1619 = vmatprep.subr.bf16.mxu0 0
    %1620 = vmatpush1.bf16.msra.mxu0 0
    %1621 = vmatprep.subr.bf16.mxu0 0
    %1622 = vmatpush1.bf16.msra.mxu0 %v1605
    %1623 = vmatprep.subr.bf16.mxu0 0
    %1624 = vmatpush2.bf16.msra.mxu0 0
    %1625 = vmatprep.subr.bf16.mxu0 0
    %1626 = vmatpush2.bf16.msra.mxu0 0
    %1627 = vmatprep.subr.bf16.mxu0 0
    %1628 = vmatpush2.bf16.msra.mxu0 0
    %1629 = vmatprep.subr.bf16.mxu0 0
    %1630 = vmatpush2.bf16.msra.mxu0 0
    %1631 = vmatprep.subr.bf16.mxu0 0
    %1632 = vmatpush2.bf16.msra.mxu0 0
    %1633 = vmatprep.subr.bf16.mxu0 0
    %1634 = vmatpush2.bf16.msra.mxu0 0
    %1635 = vmatprep.subr.bf16.mxu0 0
    %1636 = vmatpush2.bf16.msra.mxu0 0
    %1637 = vmatprep.subr.bf16.mxu0 0
    %1638 = vmatpush2.bf16.msra.mxu0 0
    %1639 = vmatprep.mubr.bf16.mxu0 0
    %1640 = vmatmul.mubr.bf16.gmra.mxu0 %v1602
    %v1641 = vpop.f32.mrf.mxu0
    %v1642 = vadd.f32 0.0, %v1641
    %v1643 = vpop.f32.mrf.mxu0
    %v1644 = vpop.f32.mrf.mxu0
    %v1645 = vpop.f32.mrf.mxu0
    %1646 = vdwg.mxu0
    %v1648 = vsel %vm869, %v1549, 0
    %v1651 = vsel %vm873, %v1553, 0
    %1653 = vmatprep.subr.bf16.mxu0 0
    %1654 = vmatpush1.bf16.msra.mxu0 0
    %1655 = vmatprep.subr.bf16.mxu0 0
    %1656 = vmatpush1.bf16.msra.mxu0 0
    %1657 = vmatprep.subr.bf16.mxu0 0
    %1658 = vmatpush1.bf16.msra.mxu0 0
    %1659 = vmatprep.subr.bf16.mxu0 0
    %1660 = vmatpush1.bf16.msra.mxu0 0
    %1661 = vmatprep.subr.bf16.mxu0 0
    %1662 = vmatpush1.bf16.msra.mxu0 0
    %1663 = vmatprep.subr.bf16.mxu0 0
    %1664 = vmatpush1.bf16.msra.mxu0 0
    %1665 = vmatprep.subr.bf16.mxu0 0
    %1666 = vmatpush1.bf16.msra.mxu0 0
    %1667 = vmatprep.subr.bf16.mxu0 0
    %1668 = vmatpush1.bf16.msra.mxu0 %v1651
    %1669 = vmatprep.subr.bf16.mxu0 0
    %1670 = vmatpush2.bf16.msra.mxu0 0
    %1671 = vmatprep.subr.bf16.mxu0 0
    %1672 = vmatpush2.bf16.msra.mxu0 0
    %1673 = vmatprep.subr.bf16.mxu0 0
    %1674 = vmatpush2.bf16.msra.mxu0 0
    %1675 = vmatprep.subr.bf16.mxu0 0
    %1676 = vmatpush2.bf16.msra.mxu0 0
    %1677 = vmatprep.subr.bf16.mxu0 0
    %1678 = vmatpush2.bf16.msra.mxu0 0
    %1679 = vmatprep.subr.bf16.mxu0 0
    %1680 = vmatpush2.bf16.msra.mxu0 0
    %1681 = vmatprep.subr.bf16.mxu0 0
    %1682 = vmatpush2.bf16.msra.mxu0 0
    %1683 = vmatprep.subr.bf16.mxu0 0
    %1684 = vmatpush2.bf16.msra.mxu0 0
    %1685 = vmatprep.mubr.bf16.mxu0 0
    %1686 = vmatmul.mubr.bf16.gmra.mxu0 %v1648
    %v1687 = vpop.f32.mrf.mxu0
    %v1688 = vadd.f32 0.0, %v1687
    %v1689 = vpop.f32.mrf.mxu0
    %v1690 = vpop.f32.mrf.mxu0
    %v1691 = vpop.f32.mrf.mxu0
    %1692 = vdwg.mxu0
    %v1694 = vsel %vm869, %v1550, 0
    %v1697 = vsel %vm873, %v1554, 0
    %1699 = vmatprep.subr.bf16.mxu0 0
    %1700 = vmatpush1.bf16.msra.mxu0 0
    %1701 = vmatprep.subr.bf16.mxu0 0
    %1702 = vmatpush1.bf16.msra.mxu0 0
    %1703 = vmatprep.subr.bf16.mxu0 0
    %1704 = vmatpush1.bf16.msra.mxu0 0
    %1705 = vmatprep.subr.bf16.mxu0 0
    %1706 = vmatpush1.bf16.msra.mxu0 0
    %1707 = vmatprep.subr.bf16.mxu0 0
    %1708 = vmatpush1.bf16.msra.mxu0 0
    %1709 = vmatprep.subr.bf16.mxu0 0
    %1710 = vmatpush1.bf16.msra.mxu0 0
    %1711 = vmatprep.subr.bf16.mxu0 0
    %1712 = vmatpush1.bf16.msra.mxu0 0
    %1713 = vmatprep.subr.bf16.mxu0 0
    %1714 = vmatpush1.bf16.msra.mxu0 %v1697
    %1715 = vmatprep.subr.bf16.mxu0 0
    %1716 = vmatpush2.bf16.msra.mxu0 0
    %1717 = vmatprep.subr.bf16.mxu0 0
    %1718 = vmatpush2.bf16.msra.mxu0 0
    %1719 = vmatprep.subr.bf16.mxu0 0
    %1720 = vmatpush2.bf16.msra.mxu0 0
    %1721 = vmatprep.subr.bf16.mxu0 0
    %1722 = vmatpush2.bf16.msra.mxu0 0
    %1723 = vmatprep.subr.bf16.mxu0 0
    %1724 = vmatpush2.bf16.msra.mxu0 0
    %1725 = vmatprep.subr.bf16.mxu0 0
    %1726 = vmatpush2.bf16.msra.mxu0 0
    %1727 = vmatprep.subr.bf16.mxu0 0
    %1728 = vmatpush2.bf16.msra.mxu0 0
    %1729 = vmatprep.subr.bf16.mxu0 0
    %1730 = vmatpush2.bf16.msra.mxu0 0
    %1731 = vmatprep.mubr.bf16.mxu0 0
    %1732 = vmatmul.mubr.bf16.gmra.mxu0 %v1694
    %v1733 = vpop.f32.mrf.mxu0
    %v1734 = vadd.f32 0.0, %v1733
    %v1735 = vpop.f32.mrf.mxu0
    %v1736 = vpop.f32.mrf.mxu0
    %v1737 = vpop.f32.mrf.mxu0
    %1738 = vdwg.mxu0
    %s1739 = scalar_lea.vmem %s15, 8
    %v1740 = vld [vmem:[%s1739] sm:$0xf]
    %v1741 = vld [vmem:[%s1739 + $0x4] sm:$0xf]
    %v1742 = vpack.c.bf16 %v1596, %v1596
    %v1743 = vpack.c.bf16 %v1642, %v1642
    %v1744 = vpack.c.bf16 %v1688, %v1688
    %v1745 = vpack.c.bf16 %v1734, %v1734
    %v1750 = vunpack.c.l.b16 %v1742
    %v1751 = vunpack.c.l.b16 %v1743
    %v1752 = vunpack.c.l.b16 %v1744
    %v1753 = vunpack.c.l.b16 %v1745
    %v1754 = vrot.slane %v1751, 7
    %v1755 = vsel %vm136, %v1754, %v1750
    %v1756 = vrot.slane %v1752, 6
    %v1757 = vsel %vm138, %v1756, %v1755
    %v1758 = vrot.slane %v1753, 5
    %v1759 = vsel %vm140, %v1758, %v1757
    %v1760 = vpack.c.b16 %v1759, %v1759
    %v1763 = vunpack.c.l.b16 %v1740
    %v1764 = vunpack.c.l.b16 %v1741
    %v1765 = vpack.c.b16 %v1764, %v1763
    %v1768 = vsel %vm317, %v1760, 0
    %1770 = vmatprep.subr.bf16.mxu0 0
    %1771 = vmatpush1.bf16.msra.mxu0 0
    %1772 = vmatprep.subr.bf16.mxu0 0
    %1773 = vmatpush1.bf16.msra.mxu0 0
    %1774 = vmatprep.subr.bf16.mxu0 0
    %1775 = vmatpush1.bf16.msra.mxu0 0
    %1776 = vmatprep.subr.bf16.mxu0 0
    %1777 = vmatpush1.bf16.msra.mxu0 0
    %1778 = vmatprep.subr.bf16.mxu0 0
    %1779 = vmatpush1.bf16.msra.mxu0 0
    %1780 = vmatprep.subr.bf16.mxu0 0
    %1781 = vmatpush1.bf16.msra.mxu0 0
    %1782 = vmatprep.subr.bf16.mxu0 0
    %1783 = vmatpush1.bf16.msra.mxu0 0
    %1784 = vmatprep.subr.bf16.mxu0 0
    %1785 = vmatpush1.bf16.msra.mxu0 %v1765
    %1786 = vmatprep.subr.bf16.mxu0 0
    %1787 = vmatpush2.bf16.msra.mxu0 0
    %1788 = vmatprep.subr.bf16.mxu0 0
    %1789 = vmatpush2.bf16.msra.mxu0 0
    %1790 = vmatprep.subr.bf16.mxu0 0
    %1791 = vmatpush2.bf16.msra.mxu0 0
    %1792 = vmatprep.subr.bf16.mxu0 0
    %1793 = vmatpush2.bf16.msra.mxu0 0
    %1794 = vmatprep.subr.bf16.mxu0 0
    %1795 = vmatpush2.bf16.msra.mxu0 0
    %1796 = vmatprep.subr.bf16.mxu0 0
    %1797 = vmatpush2.bf16.msra.mxu0 0
    %1798 = vmatprep.subr.bf16.mxu0 0
    %1799 = vmatpush2.bf16.msra.mxu0 0
    %1800 = vmatprep.subr.bf16.mxu0 0
    %1801 = vmatpush2.bf16.msra.mxu0 0
    %1802 = vmatprep.mubr.bf16.mxu0 0
    %1803 = vmatmul.mubr.bf16.gmra.mxu0 %v1768
    %v1804 = vpop.f32.mrf.mxu0
    %v1805 = vadd.f32 0.0, %v1804
    %v1806 = vpop.f32.mrf.mxu0
    %v1807 = vpop.f32.mrf.mxu0
    %v1808 = vpop.f32.mrf.mxu0
    %1809 = vdwg.mxu0
    %v1814 = vunpack.c.l.b16 %v1057
    %v1815 = vunpack.c.l.b16 %v1058
    %v1816 = vunpack.c.l.b16 %v1059
    %v1817 = vunpack.c.l.b16 %v1060
    %v1818 = vrot.slane %v1815, 7
    %v1819 = vsel %vm136, %v1818, %v1814
    %v1820 = vrot.slane %v1816, 6
    %v1821 = vsel %vm138, %v1820, %v1819
    %v1822 = vrot.slane %v1817, 5
    %v1823 = vsel %vm140, %v1822, %v1821
    %v1824 = vpack.c.b16 %v1823, %v1823
    %v1827 = vunpack.c.l.b16 %v1055
    %v1828 = vunpack.c.l.b16 %v1056
    %v1829 = vpack.c.b16 %v1828, %v1827
    %v1832 = vsel %vm317, %v1824, 0
    %1834 = vmatprep.subr.bf16.mxu0 0
    %1835 = vmatpush1.bf16.msra.mxu0 0
    %1836 = vmatprep.subr.bf16.mxu0 0
    %1837 = vmatpush1.bf16.msra.mxu0 0
    %1838 = vmatprep.subr.bf16.mxu0 0
    %1839 = vmatpush1.bf16.msra.mxu0 0
    %1840 = vmatprep.subr.bf16.mxu0 0
    %1841 = vmatpush1.bf16.msra.mxu0 0
    %1842 = vmatprep.subr.bf16.mxu0 0
    %1843 = vmatpush1.bf16.msra.mxu0 0
    %1844 = vmatprep.subr.bf16.mxu0 0
    %1845 = vmatpush1.bf16.msra.mxu0 0
    %1846 = vmatprep.subr.bf16.mxu0 0
    %1847 = vmatpush1.bf16.msra.mxu0 0
    %1848 = vmatprep.subr.bf16.mxu0 0
    %1849 = vmatpush1.bf16.msra.mxu0 %v1829
    %1850 = vmatprep.subr.bf16.mxu0 0
    %1851 = vmatpush2.bf16.msra.mxu0 0
    %1852 = vmatprep.subr.bf16.mxu0 0
    %1853 = vmatpush2.bf16.msra.mxu0 0
    %1854 = vmatprep.subr.bf16.mxu0 0
    %1855 = vmatpush2.bf16.msra.mxu0 0
    %1856 = vmatprep.subr.bf16.mxu0 0
    %1857 = vmatpush2.bf16.msra.mxu0 0
    %1858 = vmatprep.subr.bf16.mxu0 0
    %1859 = vmatpush2.bf16.msra.mxu0 0
    %1860 = vmatprep.subr.bf16.mxu0 0
    %1861 = vmatpush2.bf16.msra.mxu0 0
    %1862 = vmatprep.subr.bf16.mxu0 0
    %1863 = vmatpush2.bf16.msra.mxu0 0
    %1864 = vmatprep.subr.bf16.mxu0 0
    %1865 = vmatpush2.bf16.msra.mxu0 0
    %1866 = vmatprep.mubr.bf16.mxu0 0
    %1867 = vmatmul.mubr.bf16.gmra.mxu0 %v1832
    %v1868 = vpop.f32.mrf.mxu0
    %v1869 = vadd.f32 %v1805, %v1868
    %v1870 = vpop.f32.mrf.mxu0
    %v1871 = vpop.f32.mrf.mxu0
    %v1872 = vpop.f32.mrf.mxu0
    %1873 = vdwg.mxu0
    %v1874 = vld [vmem:[%s16] sm:$0x1]
    %v1876 = vlaneseq
    %v1877 = vshrl.u32 %v1876, 7
    %v1878 = vsub.s32 0, %v1877
    %v1879 = vrot.slane %v1874, %v1878
    %v1881 = vadd.f32 %v1869, %v1879
    %v1882 = vmul.f32 %v1543, 0.5
    %v1883 = vmul.f32 %v1544, 0.5
    %v1884 = vmul.f32 %v1545, 0.5
    %v1885 = vmul.f32 %v1546, 0.5
    %v1886 = vld [vmem:[%s17] sm:$0xf]
    %v1887 = vld [vmem:[%s17 + $0x4] sm:$0xf]
    %v1888 = vld [vmem:[%s17 + $0x8] sm:$0xf]
    %v1889 = vld [vmem:[%s17 + $0xc] sm:$0xf]
    %v1890 = vpack.c.bf16 %v1881, %v1881
    %v1891 = vld [vmem:[%s18] sm:$0x1]
    %v1893 = vlaneseq
    %v1894 = vshrl.u32 %v1893, 7
    %v1895 = vsub.s32 0, %v1894
    %v1896 = vrot.slane %v1891, %v1895
    %v1902 = vunpack.c.l.b16 %v1886
    %v1903 = vunpack.c.l.b16 %v1887
    %v1904 = vunpack.c.l.b16 %v1888
    %v1905 = vunpack.c.l.b16 %v1889
    %v1906 = vpack.c.b16 %v1903, %v1902
    %v1907 = vpack.c.b16 %v1905, %v1904
    %v1911 = vsel %vm81, %v1890, 0
    %1913 = vmatprep.subr.bf16.mxu0 0
    %1914 = vmatpush1.bf16.msra.mxu0 0
    %1915 = vmatprep.subr.bf16.mxu0 0
    %1916 = vmatpush1.bf16.msra.mxu0 0
    %1917 = vmatprep.subr.bf16.mxu0 0
    %1918 = vmatpush1.bf16.msra.mxu0 0
    %1919 = vmatprep.subr.bf16.mxu0 0
    %1920 = vmatpush1.bf16.msra.mxu0 0
    %1921 = vmatprep.subr.bf16.mxu0 0
    %1922 = vmatpush1.bf16.msra.mxu0 0
    %1923 = vmatprep.subr.bf16.mxu0 0
    %1924 = vmatpush1.bf16.msra.mxu0 0
    %1925 = vmatprep.subr.bf16.mxu0 0
    %1926 = vmatpush1.bf16.msra.mxu0 %v1907
    %1927 = vmatprep.subr.bf16.mxu0 0
    %1928 = vmatpush1.bf16.msra.mxu0 %v1906
    %1929 = vmatprep.subr.bf16.mxu0 0
    %1930 = vmatpush2.bf16.msra.mxu0 0
    %1931 = vmatprep.subr.bf16.mxu0 0
    %1932 = vmatpush2.bf16.msra.mxu0 0
    %1933 = vmatprep.subr.bf16.mxu0 0
    %1934 = vmatpush2.bf16.msra.mxu0 0
    %1935 = vmatprep.subr.bf16.mxu0 0
    %1936 = vmatpush2.bf16.msra.mxu0 0
    %1937 = vmatprep.subr.bf16.mxu0 0
    %1938 = vmatpush2.bf16.msra.mxu0 0
    %1939 = vmatprep.subr.bf16.mxu0 0
    %1940 = vmatpush2.bf16.msra.mxu0 0
    %1941 = vmatprep.subr.bf16.mxu0 0
    %1942 = vmatpush2.bf16.msra.mxu0 0
    %1943 = vmatprep.subr.bf16.mxu0 0
    %1944 = vmatpush2.bf16.msra.mxu0 0
    %1945 = vmatprep.mubr.bf16.mxu0 0
    %1946 = vmatmul.mubr.bf16.gmra.mxu0 %v1911
    %v1947 = vpop.f32.mrf.mxu0
    %v1948 = vadd.f32 %v1896, %v1947
    %v1949 = vpop.f32.mrf.mxu0
    %v1950 = vpop.f32.mrf.mxu0
    %v1951 = vpop.f32.mrf.mxu0
    %1952 = vdwg.mxu0
    %vm1953 = vcmask 257024
    %v1954 = vsel %vm1953, %v1948, 0.0
    %v1955 = vrot.slane %v1954, 4
    %v1956 = vadd.f32 %v1954, %v1955
    %v1957 = vrot.slane %v1956, 2
    %v1958 = vadd.f32 %v1956, %v1957
    %v1959 = vrot.slane %v1958, 1
    %v1960 = vadd.f32 %v1958, %v1959
    %v1961 = vmul.f32 %v1960, %v269
    %v1962 = vsub.f32 %v1948, %v1961
    %v1963 = vmul.f32 %v1962, %v1962
    %v1964 = vsel %vm1953, %v1963, 0.0
    %v1965 = vrot.slane %v1964, 4
    %v1966 = vadd.f32 %v1964, %v1965
    %v1967 = vrot.slane %v1966, 2
    %v1968 = vadd.f32 %v1966, %v1967
    %v1969 = vrot.slane %v1968, 1
    %v1970 = vadd.f32 %v1968, %v1969
    %v1971 = vmul.f32 %v1970, %v269
    %v1972 = vadd.f32 %v1971, 1e-05
    %v1973 = vrsqrt.pop %v1972
    %v1974 = vmul.f32 %v1962, %v1973
    %v1975 = vld [vmem:[%s19] sm:$0x1]
    %v1977 = vlaneseq
    %v1978 = vshrl.u32 %v1977, 7
    %v1979 = vsub.s32 0, %v1978
    %v1980 = vrot.slane %v1975, %v1979
    %v1982 = vmul.f32 %v1974, %v1980
    %v1983 = vld [vmem:[%s20] sm:$0x1]
    %v1985 = vlaneseq
    %v1986 = vshrl.u32 %v1985, 7
    %v1987 = vsub.s32 0, %v1986
    %v1988 = vrot.slane %v1983, %v1987
    %v1990 = vadd.f32 %v1982, %v1988
    %v1991 = vmax.f32 %v1990, 0.0
    %v1992 = vld [vmem:[%s21] sm:$0xf]
    %v1993 = vld [vmem:[%s21 + $0x4] sm:$0xf]
    %v1994 = vld [vmem:[%s21 + $0x8] sm:$0xf]
    %v1995 = vld [vmem:[%s21 + $0xc] sm:$0xf]
    %v1996 = vpack.c.bf16 %v1991, %v1991
    %v1997 = vld [vmem:[%s22] sm:$0x1]
    %v1999 = vlaneseq
    %v2000 = vshrl.u32 %v1999, 7
    %v2001 = vsub.s32 0, %v2000
    %v2002 = vrot.slane %v1997, %v2001
    %v2008 = vunpack.c.l.b16 %v1992
    %v2009 = vunpack.c.l.b16 %v1993
    %v2010 = vunpack.c.l.b16 %v1994
    %v2011 = vunpack.c.l.b16 %v1995
    %v2012 = vpack.c.b16 %v2009, %v2008
    %v2013 = vpack.c.b16 %v2011, %v2010
    %v2017 = vsel %vm81, %v1996, 0
    %2019 = vmatprep.subr.bf16.mxu0 0
    %2020 = vmatpush1.bf16.msra.mxu0 0
    %2021 = vmatprep.subr.bf16.mxu0 0
    %2022 = vmatpush1.bf16.msra.mxu0 0
    %2023 = vmatprep.subr.bf16.mxu0 0
    %2024 = vmatpush1.bf16.msra.mxu0 0
    %2025 = vmatprep.subr.bf16.mxu0 0
    %2026 = vmatpush1.bf16.msra.mxu0 0
    %2027 = vmatprep.subr.bf16.mxu0 0
    %2028 = vmatpush1.bf16.msra.mxu0 0
    %2029 = vmatprep.subr.bf16.mxu0 0
    %2030 = vmatpush1.bf16.msra.mxu0 0
    %2031 = vmatprep.subr.bf16.mxu0 0
    %2032 = vmatpush1.bf16.msra.mxu0 %v2013
    %2033 = vmatprep.subr.bf16.mxu0 0
    %2034 = vmatpush1.bf16.msra.mxu0 %v2012
    %2035 = vmatprep.subr.bf16.mxu0 0
    %2036 = vmatpush2.bf16.msra.mxu0 0
    %2037 = vmatprep.subr.bf16.mxu0 0
    %2038 = vmatpush2.bf16.msra.mxu0 0
    %2039 = vmatprep.subr.bf16.mxu0 0
    %2040 = vmatpush2.bf16.msra.mxu0 0
    %2041 = vmatprep.subr.bf16.mxu0 0
    %2042 = vmatpush2.bf16.msra.mxu0 0
    %2043 = vmatprep.subr.bf16.mxu0 0
    %2044 = vmatpush2.bf16.msra.mxu0 0
    %2045 = vmatprep.subr.bf16.mxu0 0
    %2046 = vmatpush2.bf16.msra.mxu0 0
    %2047 = vmatprep.subr.bf16.mxu0 0
    %2048 = vmatpush2.bf16.msra.mxu0 0
    %2049 = vmatprep.subr.bf16.mxu0 0
    %2050 = vmatpush2.bf16.msra.mxu0 0
    %2051 = vmatprep.mubr.bf16.mxu0 0
    %2052 = vmatmul.mubr.bf16.gmra.mxu0 %v2017
    %v2053 = vpop.f32.mrf.mxu0
    %v2054 = vadd.f32 %v2002, %v2053
    %v2055 = vpop.f32.mrf.mxu0
    %v2056 = vpop.f32.mrf.mxu0
    %v2057 = vpop.f32.mrf.mxu0
    %2058 = vdwg.mxu0
    %2060 = vrot.lane.b32.xlu0 %v367, 32
    %v2061 = vpop.permute.xlu0 %2060
    %2064 = vrot.lane.b32.xlu0 %v1991, 64
    %v2065 = vpop.permute.xlu0 %2064
    %v2071 = vrot.slane %v1883, 7
    %v2072 = vsel %vm136, %v2071, %v1882
    %v2073 = vrot.slane %v1884, 6
    %v2074 = vsel %vm138, %v2073, %v2072
    %v2075 = vrot.slane %v1885, 5
    %v2076 = vsel %vm140, %v2075, %v2074
    %2077 = vrot.lane.b32.xlu0 %v2076, 96
    %v2078 = vpop.permute.xlu0 %2077
    %2081 = vrot.lane.b32.xlu0 %v2054, 104
    %v2082 = vpop.permute.xlu0 %2081
    %v2084 = vsel %vm81, %v366, %v2061
    %vm2085 = vcmask 523264
    %v2086 = vsel %vm2085, %v2084, %v2065
    %vm2087 = vcmask 785408
    %v2088 = vsel %vm2087, %v2086, %v2078
    %vm2089 = vcmask 850944
    %v2090 = vsel %vm2089, %v2088, %v2082
    %vm2091 = vcmask 883712
    %v2092 = vsel %vm2091, %v2090, 0.0
    %2093 = vst [vmem:[#allocation2] sm:$0xf] %v2092
    // Predicated region
    $region94: #{tpu_custom_call.1} parent=1 // pred_check
      _
    $region95: #{tpu_custom_call.1} parent=1 // pred_check_branch
      %2095 = sbr.rel (0) target = $region97
    $region96: #{tpu_custom_call.1} parent=1 // pred_region
      %s2097 = ssub.s32 64, 64
      %2098 = vsyncadd [#allocation3], %s2097
      %s2100 = sshll.u32 [#allocation2], 4
      %s2101 = int_to_ptr.vmem [resolvable:$true] %s2100
      %2103 = dma.vmem_to_hbm [thread:$0]  %s2101, 64, %s23, [#allocation3]
    $region97: #{tpu_custom_call.1} parent=1 // pred_fallthru
      _
    // Predicated region
    $region98: #{tpu_custom_call.1} parent=1 // pred_check
      _
    $region99: #{tpu_custom_call.1} parent=1 // pred_check_branch
      %2105 = sbr.rel (0) target = $region101
    $region100: #{tpu_custom_call.1} parent=1 // pred_region
      %2106 = dma.done [#allocation3], 64
    $region101: #{tpu_custom_call.1} parent=1 // pred_fallthru
      _
    %2107 = vsyncpa [#allocation3], 1

</llo_original>
